<compile_context>
chip_gen: v6e
topology: v6e:2x2x1
jax: 0.10.0
libtpu: 0.0.40
codegen_flags: <defaults>
</compile_context>

<pallas_src>
import functools
import jax
import jax.numpy as jnp
from jax import lax
from jax.experimental import pallas as pl
from jax.experimental.pallas import tpu as pltpu


def _round_up(x, m):
    return ((x + m - 1) // m) * m


def _pad_gate_cols(w, H, H_pad):
    """(..., 3H) -> (..., 3H_pad), zero-padding each gate block [r|z|n] separately."""
    if H_pad == H:
        return w
    pad_cfg = [(0, 0)] * (w.ndim - 1) + [(0, H_pad - H)]
    parts = [jnp.pad(w[..., g * H:(g + 1) * H], pad_cfg) for g in range(3)]
    return jnp.concatenate(parts, axis=-1)


# ----------------------------------------------------------------------------
# Recurrent GRU kernel: each grid step consumes a chunk of Tc timesteps of the
# precomputed input projection, runs the serial h @ W_hh recurrence over the
# chunk (unrolled), and writes the per-step hidden states.  The hidden state
# lives in a VMEM scratch buffer that persists across grid iterations.
# ----------------------------------------------------------------------------
def _gru_recurrent_kernel(gi_ref, h0_ref, whh_ref, bhh_ref, y_ref, h_state):
    # gi_ref : (Tc, B, 3H)  precomputed x @ W_ih^T + b_ih for this time chunk
    # h0_ref : (B, H)       initial hidden state (used only for chunk 0)
    # whh_ref: (H, 3H)      recurrent weight (pre-transposed), resident in VMEM
    # bhh_ref: (1, 3H)
    # y_ref  : (Tc, B, H)   per-step hidden outputs for this chunk
    # h_state: (B, H)       VMEM scratch carrying the hidden state across chunks
    c = pl.program_id(0)
    B, H = h_state.shape
    Tc = gi_ref.shape[0]

    @pl.when(c == 0)
    def _():
        h_state[...] = h0_ref[...]

    w_hh = whh_ref[...]                                    # (H, 3H)
    b_hh = jnp.broadcast_to(bhh_ref[...], (B, 3 * H))      # broadcast hoisted out of loop

    def step(t, h):
        gi = gi_ref[t]                                     # (B, 3H), lane-aligned gates
        gh = jnp.dot(h, w_hh, preferred_element_type=jnp.float32) + b_hh
        r = jax.nn.sigmoid(gi[:, 0:H] + gh[:, 0:H])
        z = jax.nn.sigmoid(gi[:, H:2 * H] + gh[:, H:2 * H])
        n = jnp.tanh(gi[:, 2 * H:3 * H] + r * gh[:, 2 * H:3 * H])
        h_new = (1.0 - z) * n + z * h
        y_ref[t] = h_new.astype(y_ref.dtype)
        return h_new

    h_state[...] = lax.fori_loop(0, Tc, step, h_state[...], unroll=True)


def gru_recurrent(gi_all, h0, w_hh_t, b_hh, *, chunk):
    """gi_all: (T_pad, B_pad, 3*H_pad), h0: (B_pad, H_pad). Returns y: (T_pad, B_pad, H_pad)."""
    T_pad, B_pad, threeH = gi_all.shape
    H_pad = threeH // 3
    n_chunks = T_pad // chunk
    return pl.pallas_call(
        _gru_recurrent_kernel,
        out_shape=jax.ShapeDtypeStruct((T_pad, B_pad, H_pad), jnp.float32),
        grid_spec=pltpu.PrefetchScalarGridSpec(
            num_scalar_prefetch=0,
            grid=(n_chunks,),
            in_specs=[
                pl.BlockSpec((chunk, B_pad, threeH), lambda c: (c, 0, 0)),  # gi chunk
                pl.BlockSpec((B_pad, H_pad), lambda c: (0, 0)),             # h0
                pl.BlockSpec((H_pad, threeH), lambda c: (0, 0)),            # W_hh^T
                pl.BlockSpec((1, threeH), lambda c: (0, 0)),                # b_hh
            ],
            out_specs=pl.BlockSpec((chunk, B_pad, H_pad), lambda c: (c, 0, 0)),
            scratch_shapes=[pltpu.VMEM((B_pad, H_pad), jnp.float32)],
        ),
        compiler_params=pltpu.CompilerParams(
            dimension_semantics=("arbitrary",)),  # serial recurrence over time chunks
    )(gi_all, h0, w_hh_t, b_hh)


# ----------------------------------------------------------------------------
# Full forward pass (glue / projections / decoder in plain JAX).
# ----------------------------------------------------------------------------
@functools.partial(jax.jit, static_argnames=("nlayers", "chunk"))
def gru_forward(x, h0, params, nlayers, chunk=8):
    """x: (B, T, input_size) batch_first, h0: (nlayers, B, H).  Returns (nlayers*B, input_size)."""
    B, T, _ = x.shape
    H = h0.shape[-1]
    B_pad = _round_up(B, 8)        # sublane alignment
    H_pad = _round_up(H, 128)      # lane alignment (per gate)
    Tc = max(1, min(chunk, T))
    T_pad = _round_up(T, Tc)

    # sequence-major + pad time/batch (padded rows never feed back into real rows)
    x_seq = jnp.transpose(x, (1, 0, 2))                                   # (T, B, D)
    x_seq = jnp.pad(x_seq, ((0, T_pad - T), (0, B_pad - B), (0, 0)))
    h0_p = jnp.pad(h0, ((0, 0), (0, B_pad - B), (0, H_pad - H)))          # (L, B_pad, H_pad)

    layer_in = x_seq
    finals = []
    for l in range(nlayers):
        w_ih_t = _pad_gate_cols(params[f"w_ih_t_{l}"], H, H_pad)          # (D_in, 3H_pad)
        if l > 0:
            w_ih_t = jnp.pad(w_ih_t, ((0, H_pad - H), (0, 0)))            # pad input rows
        b_ih = _pad_gate_cols(params[f"b_ih_{l}"], H, H_pad)              # (1, 3H_pad)
        w_hh_t = jnp.pad(_pad_gate_cols(params[f"w_hh_t_{l}"], H, H_pad),
                         ((0, H_pad - H), (0, 0)))                        # (H_pad, 3H_pad)
        b_hh = _pad_gate_cols(params[f"b_hh_{l}"], H, H_pad)              # (1, 3H_pad)

        # Input projection hoisted out of the recurrence: one tall matmul over all
        # timesteps (no sequential dependence), bias b_ih folded in here.
        gi_all = jnp.einsum("tbd,dg->tbg", layer_in, w_ih_t) + b_ih       # (T_pad, B_pad, 3H_pad)

        y = gru_recurrent(gi_all, h0_p[l], w_hh_t, b_hh, chunk=Tc)        # (T_pad, B_pad, H_pad)
        finals.append(y[T - 1, :B, :H])     # final hidden of this layer (real rows/lanes)
        layer_in = y                        # dropout between layers = identity in eval

    hidden = jnp.stack(finals, axis=0)                                    # (nlayers, B, H)
    # Tiny decoder matmul: left to XLA (a separate pallas_call only adds launch overhead).
    decoded = hidden.reshape(nlayers * B, H) @ params["dec_w_t"] + params["dec_b"]
    return decoded


# ----------------------------------------------------------------------------
# Pure-JAX reference for correctness checking.
# ----------------------------------------------------------------------------
def gru_forward_ref(x, h0, params, nlayers):
    x_seq = jnp.transpose(x, (1, 0, 2))
    layer_in = x_seq
    finals = []
    H = h0.shape[-1]
    for l in range(nlayers):
        w_ih_t, w_hh_t = params[f"w_ih_t_{l}"], params[f"w_hh_t_{l}"]
        b_ih, b_hh = params[f"b_ih_{l}"], params[f"b_hh_{l}"]
        h = h0[l]
        ys = []
        for t in range(layer_in.shape[0]):
            gi = layer_in[t] @ w_ih_t + b_ih
            gh = h @ w_hh_t + b_hh
            r = jax.nn.sigmoid(gi[:, 0:H] + gh[:, 0:H])
            z = jax.nn.sigmoid(gi[:, H:2 * H] + gh[:, H:2 * H])
            n = jnp.tanh(gi[:, 2 * H:3 * H] + r * gh[:, 2 * H:3 * H])
            h = (1.0 - z) * n + z * h
            ys.append(h)
        finals.append(h)
        layer_in = jnp.stack(ys, axis=0)
    hidden = jnp.stack(finals, axis=0)
    L, B, H = hidden.shape
    return hidden.reshape(L * B, H) @ params["dec_w_t"] + params["dec_b"]


if __name__ == "__main__":
    # Small shapes consistent with the module's forward.
    input_size, nhid, nlayers = 16, 32, 2
    B, T = 2, 8

    key = jax.random.PRNGKey(0)
    keys = jax.random.split(key, 4 * nlayers + 3)
    k = 1.0 / jnp.sqrt(nhid)

    params = {}
    ki = 0
    for l in range(nlayers):
        d_in = input_size if l == 0 else nhid
        # stored pre-transposed: (d_in, 3H) / (H, 3H), gate order [r, z, n]
        params[f"w_ih_t_{l}"] = jax.random.uniform(keys[ki], (d_in, 3 * nhid),
                                                   jnp.float32, -k, k); ki += 1
        params[f"w_hh_t_{l}"] = jax.random.uniform(keys[ki], (nhid, 3 * nhid),
                                                   jnp.float32, -k, k); ki += 1
        params[f"b_ih_{l}"] = jax.random.uniform(keys[ki], (1, 3 * nhid),
                                                 jnp.float32, -k, k); ki += 1
        params[f"b_hh_{l}"] = jax.random.uniform(keys[ki], (1, 3 * nhid),
                                                 jnp.float32, -k, k); ki += 1
    # decoder: weight uniform(-0.1, 0.1), bias zero (per init_weights)
    params["dec_w_t"] = jax.random.uniform(keys[ki], (nhid, input_size),
                                           jnp.float32, -0.1, 0.1); ki += 1
    params["dec_b"] = jnp.zeros((1, input_size), jnp.float32)

    x = jax.random.normal(keys[ki], (B, T, input_size), jnp.float32); ki += 1
    h0 = jnp.zeros((nlayers, B, nhid), jnp.float32)   # init_hidden

    out = jax.block_until_ready(gru_forward(x, h0, params, nlayers))
    assert out.shape == (nlayers * B, input_size), out.shape

    ref = gru_forward_ref(x, h0, params, nlayers)
    max_err = float(jnp.max(jnp.abs(out - ref)))
    assert jnp.allclose(out, ref, atol=1e-4, rtol=1e-4), max_err

    print("KERNEL_OK")
</pallas_src>

<mosaic_0001>
module attributes {stable_mosaic.version = 11 : i64} {
  func.func @_gru_recurrent_kernel(%arg0: i32, %arg1: memref<8x8x384xf32, #tpu.memory_space<vmem>>, %arg2: memref<8x128xf32, #tpu.memory_space<vmem>>, %arg3: memref<128x384xf32, #tpu.memory_space<vmem>>, %arg4: memref<1x384xf32, #tpu.memory_space<vmem>>, %arg5: memref<8x8x128xf32, #tpu.memory_space<vmem>>, %arg6: memref<8x128xf32, #tpu.memory_space<vmem>>) attributes {dimension_semantics = [#tpu.dimension_semantics<arbitrary>], iteration_bounds = array<i64: 1>, scalar_prefetch = 0 : i64, scratch_operands = 1 : i64, tpu.core_type = #tpu.core_type<tc>, window_params = [{transform_indices = @transform_0, window_bounds = array<i64: 8, 8, 384>}, {pipeline_mode = #tpu.pipeline_mode<synchronous>, transform_indices = @transform_1, window_bounds = array<i64: 8, 128>}, {pipeline_mode = #tpu.pipeline_mode<synchronous>, transform_indices = @transform_2, window_bounds = array<i64: 128, 384>}, {pipeline_mode = #tpu.pipeline_mode<synchronous>, transform_indices = @transform_3, window_bounds = array<i64: 1, 384>}, {transform_indices = @transform_4, window_bounds = array<i64: 8, 8, 128>}]} {
    %c0_i32 = arith.constant 0 : i32
    %0 = arith.cmpi eq, %arg0, %c0_i32 : i32
    %1 = arith.extui %0 : i1 to i32
    %c0_i32_0 = arith.constant 0 : i32
    %2 = arith.cmpi ne, %1, %c0_i32_0 : i32
    scf.if %2 {
      %c0_72 = arith.constant 0 : index
      %c0_73 = arith.constant 0 : index
      %289 = vector.load %arg2[%c0_72, %c0_73] : memref<8x128xf32, #tpu.memory_space<vmem>>, vector<8x128xf32>
      %c0_74 = arith.constant 0 : index
      %c0_75 = arith.constant 0 : index
      %290 = vector.load %arg6[%c0_74, %c0_75] : memref<8x128xf32, #tpu.memory_space<vmem>>, vector<8x128xf32>
      tpu.vector_store %arg6[%c0_74, %c0_75], %289 {strides = array<i32>} : memref<8x128xf32, #tpu.memory_space<vmem>>, vector<8x128xf32>,
    } else {
    }
    %c0 = arith.constant 0 : index
    %c0_1 = arith.constant 0 : index
    %3 = vector.load %arg3[%c0, %c0_1] : memref<128x384xf32, #tpu.memory_space<vmem>>, vector<128x384xf32>
    %c0_2 = arith.constant 0 : index
    %c0_3 = arith.constant 0 : index
    %4 = vector.load %arg4[%c0_2, %c0_3] : memref<1x384xf32, #tpu.memory_space<vmem>>, vector<1x384xf32>
    %5 = vector.shape_cast %4 : vector<1x384xf32> to vector<1x384xf32>
    %6 = vector.broadcast %5 : vector<1x384xf32> to vector<8x384xf32>
    %c0_4 = arith.constant 0 : index
    %c0_5 = arith.constant 0 : index
    %7 = vector.load %arg6[%c0_4, %c0_5] : memref<8x128xf32, #tpu.memory_space<vmem>>, vector<8x128xf32>
    %c0_i32_6 = arith.constant 0 : i32
    %8 = arith.index_cast %c0_i32_6 : i32 to index
    %c0_7 = arith.constant 0 : index
    %c0_8 = arith.constant 0 : index
    %9 = vector.load %arg1[%8, %c0_7, %c0_8] : memref<8x8x384xf32, #tpu.memory_space<vmem>>, vector<1x8x384xf32>
    %10 = vector.shape_cast %9 : vector<1x8x384xf32> to vector<8x384xf32>
    %cst = arith.constant dense<0.000000e+00> : vector<8x384xf32>
    %11 = tpu.matmul %7, %3, %cst {dimension_numbers = #tpu.dot_dimension_numbers<[1], [0], [0], [1], [0, 0, 1, 1], [], []>} : vector<8x128xf32>, vector<128x384xf32>, vector<8x384xf32> -> vector<8x384xf32>
    %12 = arith.addf %11, %6 : vector<8x384xf32>
    %13 = vector.extract_strided_slice %10 {offsets = [0, 0], sizes = [8, 128], strides = [1, 1]} : vector<8x384xf32> to vector<8x128xf32>
    %14 = vector.extract_strided_slice %12 {offsets = [0, 0], sizes = [8, 128], strides = [1, 1]} : vector<8x384xf32> to vector<8x128xf32>
    %15 = arith.addf %13, %14 : vector<8x128xf32>
    %16 = arith.negf %15 : vector<8x128xf32>
    %17 = math.exp %16 : vector<8x128xf32>
    %cst_9 = arith.constant 1.000000e+00 : f32
    %18 = vector.broadcast %cst_9 : f32 to vector<8x128xf32>
    %19 = arith.addf %18, %17 : vector<8x128xf32>
    %20 = arith.divf %18, %19 : vector<8x128xf32>
    %21 = vector.extract_strided_slice %10 {offsets = [0, 128], sizes = [8, 128], strides = [1, 1]} : vector<8x384xf32> to vector<8x128xf32>
    %22 = vector.extract_strided_slice %12 {offsets = [0, 128], sizes = [8, 128], strides = [1, 1]} : vector<8x384xf32> to vector<8x128xf32>
    %23 = arith.addf %21, %22 : vector<8x128xf32>
    %24 = arith.negf %23 : vector<8x128xf32>
    %25 = math.exp %24 : vector<8x128xf32>
    %cst_10 = arith.constant 1.000000e+00 : f32
    %26 = vector.broadcast %cst_10 : f32 to vector<8x128xf32>
    %27 = arith.addf %26, %25 : vector<8x128xf32>
    %28 = arith.divf %26, %27 : vector<8x128xf32>
    %29 = vector.extract_strided_slice %10 {offsets = [0, 256], sizes = [8, 128], strides = [1, 1]} : vector<8x384xf32> to vector<8x128xf32>
    %30 = vector.extract_strided_slice %12 {offsets = [0, 256], sizes = [8, 128], strides = [1, 1]} : vector<8x384xf32> to vector<8x128xf32>
    %31 = arith.mulf %20, %30 : vector<8x128xf32>
    %32 = arith.addf %29, %31 : vector<8x128xf32>
    %33 = math.tanh %32 : vector<8x128xf32>
    %cst_11 = arith.constant 1.000000e+00 : f32
    %34 = vector.broadcast %cst_11 : f32 to vector<8x128xf32>
    %35 = arith.subf %34, %28 : vector<8x128xf32>
    %36 = arith.mulf %35, %33 : vector<8x128xf32>
    %37 = arith.mulf %28, %7 : vector<8x128xf32>
    %38 = arith.addf %36, %37 : vector<8x128xf32>
    %39 = arith.index_cast %c0_i32_6 : i32 to index
    %c0_12 = arith.constant 0 : index
    %c0_13 = arith.constant 0 : index
    %40 = vector.load %arg5[%39, %c0_12, %c0_13] : memref<8x8x128xf32, #tpu.memory_space<vmem>>, vector<1x8x128xf32>
    %41 = vector.shape_cast %40 : vector<1x8x128xf32> to vector<8x128xf32>
    %42 = vector.shape_cast %38 : vector<8x128xf32> to vector<1x8x128xf32>
    tpu.vector_store %arg5[%39, %c0_12, %c0_13], %42 {strides = array<i32>} : memref<8x8x128xf32, #tpu.memory_space<vmem>>, vector<1x8x128xf32>,
    %c1_i32 = arith.constant 1 : i32
    %43 = arith.index_cast %c1_i32 : i32 to index
    %c0_14 = arith.constant 0 : index
    %c0_15 = arith.constant 0 : index
    %44 = vector.load %arg1[%43, %c0_14, %c0_15] : memref<8x8x384xf32, #tpu.memory_space<vmem>>, vector<1x8x384xf32>
    %45 = vector.shape_cast %44 : vector<1x8x384xf32> to vector<8x384xf32>
    %cst_16 = arith.constant dense<0.000000e+00> : vector<8x384xf32>
    %46 = tpu.matmul %38, %3, %cst_16 {dimension_numbers = #tpu.dot_dimension_numbers<[1], [0], [0], [1], [0, 0, 1, 1], [], []>} : vector<8x128xf32>, vector<128x384xf32>, vector<8x384xf32> -> vector<8x384xf32>
    %47 = arith.addf %46, %6 : vector<8x384xf32>
    %48 = vector.extract_strided_slice %45 {offsets = [0, 0], sizes = [8, 128], strides = [1, 1]} : vector<8x384xf32> to vector<8x128xf32>
    %49 = vector.extract_strided_slice %47 {offsets = [0, 0], sizes = [8, 128], strides = [1, 1]} : vector<8x384xf32> to vector<8x128xf32>
    %50 = arith.addf %48, %49 : vector<8x128xf32>
    %51 = arith.negf %50 : vector<8x128xf32>
    %52 = math.exp %51 : vector<8x128xf32>
    %cst_17 = arith.constant 1.000000e+00 : f32
    %53 = vector.broadcast %cst_17 : f32 to vector<8x128xf32>
    %54 = arith.addf %53, %52 : vector<8x128xf32>
    %55 = arith.divf %53, %54 : vector<8x128xf32>
    %56 = vector.extract_strided_slice %45 {offsets = [0, 128], sizes = [8, 128], strides = [1, 1]} : vector<8x384xf32> to vector<8x128xf32>
    %57 = vector.extract_strided_slice %47 {offsets = [0, 128], sizes = [8, 128], strides = [1, 1]} : vector<8x384xf32> to vector<8x128xf32>
    %58 = arith.addf %56, %57 : vector<8x128xf32>
    %59 = arith.negf %58 : vector<8x128xf32>
    %60 = math.exp %59 : vector<8x128xf32>
    %cst_18 = arith.constant 1.000000e+00 : f32
    %61 = vector.broadcast %cst_18 : f32 to vector<8x128xf32>
    %62 = arith.addf %61, %60 : vector<8x128xf32>
    %63 = arith.divf %61, %62 : vector<8x128xf32>
    %64 = vector.extract_strided_slice %45 {offsets = [0, 256], sizes = [8, 128], strides = [1, 1]} : vector<8x384xf32> to vector<8x128xf32>
    %65 = vector.extract_strided_slice %47 {offsets = [0, 256], sizes = [8, 128], strides = [1, 1]} : vector<8x384xf32> to vector<8x128xf32>
    %66 = arith.mulf %55, %65 : vector<8x128xf32>
    %67 = arith.addf %64, %66 : vector<8x128xf32>
    %68 = math.tanh %67 : vector<8x128xf32>
    %cst_19 = arith.constant 1.000000e+00 : f32
    %69 = vector.broadcast %cst_19 : f32 to vector<8x128xf32>
    %70 = arith.subf %69, %63 : vector<8x128xf32>
    %71 = arith.mulf %70, %68 : vector<8x128xf32>
    %72 = arith.mulf %63, %38 : vector<8x128xf32>
    %73 = arith.addf %71, %72 : vector<8x128xf32>
    %74 = arith.index_cast %c1_i32 : i32 to index
    %c0_20 = arith.constant 0 : index
    %c0_21 = arith.constant 0 : index
    %75 = vector.load %arg5[%74, %c0_20, %c0_21] : memref<8x8x128xf32, #tpu.memory_space<vmem>>, vector<1x8x128xf32>
    %76 = vector.shape_cast %75 : vector<1x8x128xf32> to vector<8x128xf32>
    %77 = vector.shape_cast %73 : vector<8x128xf32> to vector<1x8x128xf32>
    tpu.vector_store %arg5[%74, %c0_20, %c0_21], %77 {strides = array<i32>} : memref<8x8x128xf32, #tpu.memory_space<vmem>>, vector<1x8x128xf32>,
    %c2_i32 = arith.constant 2 : i32
    %78 = arith.index_cast %c2_i32 : i32 to index
    %c0_22 = arith.constant 0 : index
    %c0_23 = arith.constant 0 : index
    %79 = vector.load %arg1[%78, %c0_22, %c0_23] : memref<8x8x384xf32, #tpu.memory_space<vmem>>, vector<1x8x384xf32>
    %80 = vector.shape_cast %79 : vector<1x8x384xf32> to vector<8x384xf32>
    %cst_24 = arith.constant dense<0.000000e+00> : vector<8x384xf32>
    %81 = tpu.matmul %73, %3, %cst_24 {dimension_numbers = #tpu.dot_dimension_numbers<[1], [0], [0], [1], [0, 0, 1, 1], [], []>} : vector<8x128xf32>, vector<128x384xf32>, vector<8x384xf32> -> vector<8x384xf32>
    %82 = arith.addf %81, %6 : vector<8x384xf32>
    %83 = vector.extract_strided_slice %80 {offsets = [0, 0], sizes = [8, 128], strides = [1, 1]} : vector<8x384xf32> to vector<8x128xf32>
    %84 = vector.extract_strided_slice %82 {offsets = [0, 0], sizes = [8, 128], strides = [1, 1]} : vector<8x384xf32> to vector<8x128xf32>
    %85 = arith.addf %83, %84 : vector<8x128xf32>
    %86 = arith.negf %85 : vector<8x128xf32>
    %87 = math.exp %86 : vector<8x128xf32>
    %cst_25 = arith.constant 1.000000e+00 : f32
    %88 = vector.broadcast %cst_25 : f32 to vector<8x128xf32>
    %89 = arith.addf %88, %87 : vector<8x128xf32>
    %90 = arith.divf %88, %89 : vector<8x128xf32>
    %91 = vector.extract_strided_slice %80 {offsets = [0, 128], sizes = [8, 128], strides = [1, 1]} : vector<8x384xf32> to vector<8x128xf32>
    %92 = vector.extract_strided_slice %82 {offsets = [0, 128], sizes = [8, 128], strides = [1, 1]} : vector<8x384xf32> to vector<8x128xf32>
    %93 = arith.addf %91, %92 : vector<8x128xf32>
    %94 = arith.negf %93 : vector<8x128xf32>
    %95 = math.exp %94 : vector<8x128xf32>
    %cst_26 = arith.constant 1.000000e+00 : f32
    %96 = vector.broadcast %cst_26 : f32 to vector<8x128xf32>
    %97 = arith.addf %96, %95 : vector<8x128xf32>
    %98 = arith.divf %96, %97 : vector<8x128xf32>
    %99 = vector.extract_strided_slice %80 {offsets = [0, 256], sizes = [8, 128], strides = [1, 1]} : vector<8x384xf32> to vector<8x128xf32>
    %100 = vector.extract_strided_slice %82 {offsets = [0, 256], sizes = [8, 128], strides = [1, 1]} : vector<8x384xf32> to vector<8x128xf32>
    %101 = arith.mulf %90, %100 : vector<8x128xf32>
    %102 = arith.addf %99, %101 : vector<8x128xf32>
    %103 = math.tanh %102 : vector<8x128xf32>
    %cst_27 = arith.constant 1.000000e+00 : f32
    %104 = vector.broadcast %cst_27 : f32 to vector<8x128xf32>
    %105 = arith.subf %104, %98 : vector<8x128xf32>
    %106 = arith.mulf %105, %103 : vector<8x128xf32>
    %107 = arith.mulf %98, %73 : vector<8x128xf32>
    %108 = arith.addf %106, %107 : vector<8x128xf32>
    %109 = arith.index_cast %c2_i32 : i32 to index
    %c0_28 = arith.constant 0 : index
    %c0_29 = arith.constant 0 : index
    %110 = vector.load %arg5[%109, %c0_28, %c0_29] : memref<8x8x128xf32, #tpu.memory_space<vmem>>, vector<1x8x128xf32>
    %111 = vector.shape_cast %110 : vector<1x8x128xf32> to vector<8x128xf32>
    %112 = vector.shape_cast %108 : vector<8x128xf32> to vector<1x8x128xf32>
    tpu.vector_store %arg5[%109, %c0_28, %c0_29], %112 {strides = array<i32>} : memref<8x8x128xf32, #tpu.memory_space<vmem>>, vector<1x8x128xf32>,
    %c3_i32 = arith.constant 3 : i32
    %113 = arith.index_cast %c3_i32 : i32 to index
    %c0_30 = arith.constant 0 : index
    %c0_31 = arith.constant 0 : index
    %114 = vector.load %arg1[%113, %c0_30, %c0_31] : memref<8x8x384xf32, #tpu.memory_space<vmem>>, vector<1x8x384xf32>
    %115 = vector.shape_cast %114 : vector<1x8x384xf32> to vector<8x384xf32>
    %cst_32 = arith.constant dense<0.000000e+00> : vector<8x384xf32>
    %116 = tpu.matmul %108, %3, %cst_32 {dimension_numbers = #tpu.dot_dimension_numbers<[1], [0], [0], [1], [0, 0, 1, 1], [], []>} : vector<8x128xf32>, vector<128x384xf32>, vector<8x384xf32> -> vector<8x384xf32>
    %117 = arith.addf %116, %6 : vector<8x384xf32>
    %118 = vector.extract_strided_slice %115 {offsets = [0, 0], sizes = [8, 128], strides = [1, 1]} : vector<8x384xf32> to vector<8x128xf32>
    %119 = vector.extract_strided_slice %117 {offsets = [0, 0], sizes = [8, 128], strides = [1, 1]} : vector<8x384xf32> to vector<8x128xf32>
    %120 = arith.addf %118, %119 : vector<8x128xf32>
    %121 = arith.negf %120 : vector<8x128xf32>
    %122 = math.exp %121 : vector<8x128xf32>
    %cst_33 = arith.constant 1.000000e+00 : f32
    %123 = vector.broadcast %cst_33 : f32 to vector<8x128xf32>
    %124 = arith.addf %123, %122 : vector<8x128xf32>
    %125 = arith.divf %123, %124 : vector<8x128xf32>
    %126 = vector.extract_strided_slice %115 {offsets = [0, 128], sizes = [8, 128], strides = [1, 1]} : vector<8x384xf32> to vector<8x128xf32>
    %127 = vector.extract_strided_slice %117 {offsets = [0, 128], sizes = [8, 128], strides = [1, 1]} : vector<8x384xf32> to vector<8x128xf32>
    %128 = arith.addf %126, %127 : vector<8x128xf32>
    %129 = arith.negf %128 : vector<8x128xf32>
    %130 = math.exp %129 : vector<8x128xf32>
    %cst_34 = arith.constant 1.000000e+00 : f32
    %131 = vector.broadcast %cst_34 : f32 to vector<8x128xf32>
    %132 = arith.addf %131, %130 : vector<8x128xf32>
    %133 = arith.divf %131, %132 : vector<8x128xf32>
    %134 = vector.extract_strided_slice %115 {offsets = [0, 256], sizes = [8, 128], strides = [1, 1]} : vector<8x384xf32> to vector<8x128xf32>
    %135 = vector.extract_strided_slice %117 {offsets = [0, 256], sizes = [8, 128], strides = [1, 1]} : vector<8x384xf32> to vector<8x128xf32>
    %136 = arith.mulf %125, %135 : vector<8x128xf32>
    %137 = arith.addf %134, %136 : vector<8x128xf32>
    %138 = math.tanh %137 : vector<8x128xf32>
    %cst_35 = arith.constant 1.000000e+00 : f32
    %139 = vector.broadcast %cst_35 : f32 to vector<8x128xf32>
    %140 = arith.subf %139, %133 : vector<8x128xf32>
    %141 = arith.mulf %140, %138 : vector<8x128xf32>
    %142 = arith.mulf %133, %108 : vector<8x128xf32>
    %143 = arith.addf %141, %142 : vector<8x128xf32>
    %144 = arith.index_cast %c3_i32 : i32 to index
    %c0_36 = arith.constant 0 : index
    %c0_37 = arith.constant 0 : index
    %145 = vector.load %arg5[%144, %c0_36, %c0_37] : memref<8x8x128xf32, #tpu.memory_space<vmem>>, vector<1x8x128xf32>
    %146 = vector.shape_cast %145 : vector<1x8x128xf32> to vector<8x128xf32>
    %147 = vector.shape_cast %143 : vector<8x128xf32> to vector<1x8x128xf32>
    tpu.vector_store %arg5[%144, %c0_36, %c0_37], %147 {strides = array<i32>} : memref<8x8x128xf32, #tpu.memory_space<vmem>>, vector<1x8x128xf32>,
    %c4_i32 = arith.constant 4 : i32
    %148 = arith.index_cast %c4_i32 : i32 to index
    %c0_38 = arith.constant 0 : index
    %c0_39 = arith.constant 0 : index
    %149 = vector.load %arg1[%148, %c0_38, %c0_39] : memref<8x8x384xf32, #tpu.memory_space<vmem>>, vector<1x8x384xf32>
    %150 = vector.shape_cast %149 : vector<1x8x384xf32> to vector<8x384xf32>
    %cst_40 = arith.constant dense<0.000000e+00> : vector<8x384xf32>
    %151 = tpu.matmul %143, %3, %cst_40 {dimension_numbers = #tpu.dot_dimension_numbers<[1], [0], [0], [1], [0, 0, 1, 1], [], []>} : vector<8x128xf32>, vector<128x384xf32>, vector<8x384xf32> -> vector<8x384xf32>
    %152 = arith.addf %151, %6 : vector<8x384xf32>
    %153 = vector.extract_strided_slice %150 {offsets = [0, 0], sizes = [8, 128], strides = [1, 1]} : vector<8x384xf32> to vector<8x128xf32>
    %154 = vector.extract_strided_slice %152 {offsets = [0, 0], sizes = [8, 128], strides = [1, 1]} : vector<8x384xf32> to vector<8x128xf32>
    %155 = arith.addf %153, %154 : vector<8x128xf32>
    %156 = arith.negf %155 : vector<8x128xf32>
    %157 = math.exp %156 : vector<8x128xf32>
    %cst_41 = arith.constant 1.000000e+00 : f32
    %158 = vector.broadcast %cst_41 : f32 to vector<8x128xf32>
    %159 = arith.addf %158, %157 : vector<8x128xf32>
    %160 = arith.divf %158, %159 : vector<8x128xf32>
    %161 = vector.extract_strided_slice %150 {offsets = [0, 128], sizes = [8, 128], strides = [1, 1]} : vector<8x384xf32> to vector<8x128xf32>
    %162 = vector.extract_strided_slice %152 {offsets = [0, 128], sizes = [8, 128], strides = [1, 1]} : vector<8x384xf32> to vector<8x128xf32>
    %163 = arith.addf %161, %162 : vector<8x128xf32>
    %164 = arith.negf %163 : vector<8x128xf32>
    %165 = math.exp %164 : vector<8x128xf32>
    %cst_42 = arith.constant 1.000000e+00 : f32
    %166 = vector.broadcast %cst_42 : f32 to vector<8x128xf32>
    %167 = arith.addf %166, %165 : vector<8x128xf32>
    %168 = arith.divf %166, %167 : vector<8x128xf32>
    %169 = vector.extract_strided_slice %150 {offsets = [0, 256], sizes = [8, 128], strides = [1, 1]} : vector<8x384xf32> to vector<8x128xf32>
    %170 = vector.extract_strided_slice %152 {offsets = [0, 256], sizes = [8, 128], strides = [1, 1]} : vector<8x384xf32> to vector<8x128xf32>
    %171 = arith.mulf %160, %170 : vector<8x128xf32>
    %172 = arith.addf %169, %171 : vector<8x128xf32>
    %173 = math.tanh %172 : vector<8x128xf32>
    %cst_43 = arith.constant 1.000000e+00 : f32
    %174 = vector.broadcast %cst_43 : f32 to vector<8x128xf32>
    %175 = arith.subf %174, %168 : vector<8x128xf32>
    %176 = arith.mulf %175, %173 : vector<8x128xf32>
    %177 = arith.mulf %168, %143 : vector<8x128xf32>
    %178 = arith.addf %176, %177 : vector<8x128xf32>
    %179 = arith.index_cast %c4_i32 : i32 to index
    %c0_44 = arith.constant 0 : index
    %c0_45 = arith.constant 0 : index
    %180 = vector.load %arg5[%179, %c0_44, %c0_45] : memref<8x8x128xf32, #tpu.memory_space<vmem>>, vector<1x8x128xf32>
    %181 = vector.shape_cast %180 : vector<1x8x128xf32> to vector<8x128xf32>
    %182 = vector.shape_cast %178 : vector<8x128xf32> to vector<1x8x128xf32>
    tpu.vector_store %arg5[%179, %c0_44, %c0_45], %182 {strides = array<i32>} : memref<8x8x128xf32, #tpu.memory_space<vmem>>, vector<1x8x128xf32>,
    %c5_i32 = arith.constant 5 : i32
    %183 = arith.index_cast %c5_i32 : i32 to index
    %c0_46 = arith.constant 0 : index
    %c0_47 = arith.constant 0 : index
    %184 = vector.load %arg1[%183, %c0_46, %c0_47] : memref<8x8x384xf32, #tpu.memory_space<vmem>>, vector<1x8x384xf32>
    %185 = vector.shape_cast %184 : vector<1x8x384xf32> to vector<8x384xf32>
    %cst_48 = arith.constant dense<0.000000e+00> : vector<8x384xf32>
    %186 = tpu.matmul %178, %3, %cst_48 {dimension_numbers = #tpu.dot_dimension_numbers<[1], [0], [0], [1], [0, 0, 1, 1], [], []>} : vector<8x128xf32>, vector<128x384xf32>, vector<8x384xf32> -> vector<8x384xf32>
    %187 = arith.addf %186, %6 : vector<8x384xf32>
    %188 = vector.extract_strided_slice %185 {offsets = [0, 0], sizes = [8, 128], strides = [1, 1]} : vector<8x384xf32> to vector<8x128xf32>
    %189 = vector.extract_strided_slice %187 {offsets = [0, 0], sizes = [8, 128], strides = [1, 1]} : vector<8x384xf32> to vector<8x128xf32>
    %190 = arith.addf %188, %189 : vector<8x128xf32>
    %191 = arith.negf %190 : vector<8x128xf32>
    %192 = math.exp %191 : vector<8x128xf32>
    %cst_49 = arith.constant 1.000000e+00 : f32
    %193 = vector.broadcast %cst_49 : f32 to vector<8x128xf32>
    %194 = arith.addf %193, %192 : vector<8x128xf32>
    %195 = arith.divf %193, %194 : vector<8x128xf32>
    %196 = vector.extract_strided_slice %185 {offsets = [0, 128], sizes = [8, 128], strides = [1, 1]} : vector<8x384xf32> to vector<8x128xf32>
    %197 = vector.extract_strided_slice %187 {offsets = [0, 128], sizes = [8, 128], strides = [1, 1]} : vector<8x384xf32> to vector<8x128xf32>
    %198 = arith.addf %196, %197 : vector<8x128xf32>
    %199 = arith.negf %198 : vector<8x128xf32>
    %200 = math.exp %199 : vector<8x128xf32>
    %cst_50 = arith.constant 1.000000e+00 : f32
    %201 = vector.broadcast %cst_50 : f32 to vector<8x128xf32>
    %202 = arith.addf %201, %200 : vector<8x128xf32>
    %203 = arith.divf %201, %202 : vector<8x128xf32>
    %204 = vector.extract_strided_slice %185 {offsets = [0, 256], sizes = [8, 128], strides = [1, 1]} : vector<8x384xf32> to vector<8x128xf32>
    %205 = vector.extract_strided_slice %187 {offsets = [0, 256], sizes = [8, 128], strides = [1, 1]} : vector<8x384xf32> to vector<8x128xf32>
    %206 = arith.mulf %195, %205 : vector<8x128xf32>
    %207 = arith.addf %204, %206 : vector<8x128xf32>
    %208 = math.tanh %207 : vector<8x128xf32>
    %cst_51 = arith.constant 1.000000e+00 : f32
    %209 = vector.broadcast %cst_51 : f32 to vector<8x128xf32>
    %210 = arith.subf %209, %203 : vector<8x128xf32>
    %211 = arith.mulf %210, %208 : vector<8x128xf32>
    %212 = arith.mulf %203, %178 : vector<8x128xf32>
    %213 = arith.addf %211, %212 : vector<8x128xf32>
    %214 = arith.index_cast %c5_i32 : i32 to index
    %c0_52 = arith.constant 0 : index
    %c0_53 = arith.constant 0 : index
    %215 = vector.load %arg5[%214, %c0_52, %c0_53] : memref<8x8x128xf32, #tpu.memory_space<vmem>>, vector<1x8x128xf32>
    %216 = vector.shape_cast %215 : vector<1x8x128xf32> to vector<8x128xf32>
    %217 = vector.shape_cast %213 : vector<8x128xf32> to vector<1x8x128xf32>
    tpu.vector_store %arg5[%214, %c0_52, %c0_53], %217 {strides = array<i32>} : memref<8x8x128xf32, #tpu.memory_space<vmem>>, vector<1x8x128xf32>,
    %c6_i32 = arith.constant 6 : i32
    %218 = arith.index_cast %c6_i32 : i32 to index
    %c0_54 = arith.constant 0 : index
    %c0_55 = arith.constant 0 : index
    %219 = vector.load %arg1[%218, %c0_54, %c0_55] : memref<8x8x384xf32, #tpu.memory_space<vmem>>, vector<1x8x384xf32>
    %220 = vector.shape_cast %219 : vector<1x8x384xf32> to vector<8x384xf32>
    %cst_56 = arith.constant dense<0.000000e+00> : vector<8x384xf32>
    %221 = tpu.matmul %213, %3, %cst_56 {dimension_numbers = #tpu.dot_dimension_numbers<[1], [0], [0], [1], [0, 0, 1, 1], [], []>} : vector<8x128xf32>, vector<128x384xf32>, vector<8x384xf32> -> vector<8x384xf32>
    %222 = arith.addf %221, %6 : vector<8x384xf32>
    %223 = vector.extract_strided_slice %220 {offsets = [0, 0], sizes = [8, 128], strides = [1, 1]} : vector<8x384xf32> to vector<8x128xf32>
    %224 = vector.extract_strided_slice %222 {offsets = [0, 0], sizes = [8, 128], strides = [1, 1]} : vector<8x384xf32> to vector<8x128xf32>
    %225 = arith.addf %223, %224 : vector<8x128xf32>
    %226 = arith.negf %225 : vector<8x128xf32>
    %227 = math.exp %226 : vector<8x128xf32>
    %cst_57 = arith.constant 1.000000e+00 : f32
    %228 = vector.broadcast %cst_57 : f32 to vector<8x128xf32>
    %229 = arith.addf %228, %227 : vector<8x128xf32>
    %230 = arith.divf %228, %229 : vector<8x128xf32>
    %231 = vector.extract_strided_slice %220 {offsets = [0, 128], sizes = [8, 128], strides = [1, 1]} : vector<8x384xf32> to vector<8x128xf32>
    %232 = vector.extract_strided_slice %222 {offsets = [0, 128], sizes = [8, 128], strides = [1, 1]} : vector<8x384xf32> to vector<8x128xf32>
    %233 = arith.addf %231, %232 : vector<8x128xf32>
    %234 = arith.negf %233 : vector<8x128xf32>
    %235 = math.exp %234 : vector<8x128xf32>
    %cst_58 = arith.constant 1.000000e+00 : f32
    %236 = vector.broadcast %cst_58 : f32 to vector<8x128xf32>
    %237 = arith.addf %236, %235 : vector<8x128xf32>
    %238 = arith.divf %236, %237 : vector<8x128xf32>
    %239 = vector.extract_strided_slice %220 {offsets = [0, 256], sizes = [8, 128], strides = [1, 1]} : vector<8x384xf32> to vector<8x128xf32>
    %240 = vector.extract_strided_slice %222 {offsets = [0, 256], sizes = [8, 128], strides = [1, 1]} : vector<8x384xf32> to vector<8x128xf32>
    %241 = arith.mulf %230, %240 : vector<8x128xf32>
    %242 = arith.addf %239, %241 : vector<8x128xf32>
    %243 = math.tanh %242 : vector<8x128xf32>
    %cst_59 = arith.constant 1.000000e+00 : f32
    %244 = vector.broadcast %cst_59 : f32 to vector<8x128xf32>
    %245 = arith.subf %244, %238 : vector<8x128xf32>
    %246 = arith.mulf %245, %243 : vector<8x128xf32>
    %247 = arith.mulf %238, %213 : vector<8x128xf32>
    %248 = arith.addf %246, %247 : vector<8x128xf32>
    %249 = arith.index_cast %c6_i32 : i32 to index
    %c0_60 = arith.constant 0 : index
    %c0_61 = arith.constant 0 : index
    %250 = vector.load %arg5[%249, %c0_60, %c0_61] : memref<8x8x128xf32, #tpu.memory_space<vmem>>, vector<1x8x128xf32>
    %251 = vector.shape_cast %250 : vector<1x8x128xf32> to vector<8x128xf32>
    %252 = vector.shape_cast %248 : vector<8x128xf32> to vector<1x8x128xf32>
    tpu.vector_store %arg5[%249, %c0_60, %c0_61], %252 {strides = array<i32>} : memref<8x8x128xf32, #tpu.memory_space<vmem>>, vector<1x8x128xf32>,
    %c7_i32 = arith.constant 7 : i32
    %253 = arith.index_cast %c7_i32 : i32 to index
    %c0_62 = arith.constant 0 : index
    %c0_63 = arith.constant 0 : index
    %254 = vector.load %arg1[%253, %c0_62, %c0_63] : memref<8x8x384xf32, #tpu.memory_space<vmem>>, vector<1x8x384xf32>
    %255 = vector.shape_cast %254 : vector<1x8x384xf32> to vector<8x384xf32>
    %cst_64 = arith.constant dense<0.000000e+00> : vector<8x384xf32>
    %256 = tpu.matmul %248, %3, %cst_64 {dimension_numbers = #tpu.dot_dimension_numbers<[1], [0], [0], [1], [0, 0, 1, 1], [], []>} : vector<8x128xf32>, vector<128x384xf32>, vector<8x384xf32> -> vector<8x384xf32>
    %257 = arith.addf %256, %6 : vector<8x384xf32>
    %258 = vector.extract_strided_slice %255 {offsets = [0, 0], sizes = [8, 128], strides = [1, 1]} : vector<8x384xf32> to vector<8x128xf32>
    %259 = vector.extract_strided_slice %257 {offsets = [0, 0], sizes = [8, 128], strides = [1, 1]} : vector<8x384xf32> to vector<8x128xf32>
    %260 = arith.addf %258, %259 : vector<8x128xf32>
    %261 = arith.negf %260 : vector<8x128xf32>
    %262 = math.exp %261 : vector<8x128xf32>
    %cst_65 = arith.constant 1.000000e+00 : f32
    %263 = vector.broadcast %cst_65 : f32 to vector<8x128xf32>
    %264 = arith.addf %263, %262 : vector<8x128xf32>
    %265 = arith.divf %263, %264 : vector<8x128xf32>
    %266 = vector.extract_strided_slice %255 {offsets = [0, 128], sizes = [8, 128], strides = [1, 1]} : vector<8x384xf32> to vector<8x128xf32>
    %267 = vector.extract_strided_slice %257 {offsets = [0, 128], sizes = [8, 128], strides = [1, 1]} : vector<8x384xf32> to vector<8x128xf32>
    %268 = arith.addf %266, %267 : vector<8x128xf32>
    %269 = arith.negf %268 : vector<8x128xf32>
    %270 = math.exp %269 : vector<8x128xf32>
    %cst_66 = arith.constant 1.000000e+00 : f32
    %271 = vector.broadcast %cst_66 : f32 to vector<8x128xf32>
    %272 = arith.addf %271, %270 : vector<8x128xf32>
    %273 = arith.divf %271, %272 : vector<8x128xf32>
    %274 = vector.extract_strided_slice %255 {offsets = [0, 256], sizes = [8, 128], strides = [1, 1]} : vector<8x384xf32> to vector<8x128xf32>
    %275 = vector.extract_strided_slice %257 {offsets = [0, 256], sizes = [8, 128], strides = [1, 1]} : vector<8x384xf32> to vector<8x128xf32>
    %276 = arith.mulf %265, %275 : vector<8x128xf32>
    %277 = arith.addf %274, %276 : vector<8x128xf32>
    %278 = math.tanh %277 : vector<8x128xf32>
    %cst_67 = arith.constant 1.000000e+00 : f32
    %279 = vector.broadcast %cst_67 : f32 to vector<8x128xf32>
    %280 = arith.subf %279, %273 : vector<8x128xf32>
    %281 = arith.mulf %280, %278 : vector<8x128xf32>
    %282 = arith.mulf %273, %248 : vector<8x128xf32>
    %283 = arith.addf %281, %282 : vector<8x128xf32>
    %284 = arith.index_cast %c7_i32 : i32 to index
    %c0_68 = arith.constant 0 : index
    %c0_69 = arith.constant 0 : index
    %285 = vector.load %arg5[%284, %c0_68, %c0_69] : memref<8x8x128xf32, #tpu.memory_space<vmem>>, vector<1x8x128xf32>
    %286 = vector.shape_cast %285 : vector<1x8x128xf32> to vector<8x128xf32>
    %287 = vector.shape_cast %283 : vector<8x128xf32> to vector<1x8x128xf32>
    tpu.vector_store %arg5[%284, %c0_68, %c0_69], %287 {strides = array<i32>} : memref<8x8x128xf32, #tpu.memory_space<vmem>>, vector<1x8x128xf32>,
    %c8_i32 = arith.constant 8 : i32
    %c0_70 = arith.constant 0 : index
    %c0_71 = arith.constant 0 : index
    %288 = vector.load %arg6[%c0_70, %c0_71] : memref<8x128xf32, #tpu.memory_space<vmem>>, vector<8x128xf32>
    tpu.vector_store %arg6[%c0_70, %c0_71], %283 {strides = array<i32>} : memref<8x128xf32, #tpu.memory_space<vmem>>, vector<8x128xf32>,
    return
  }
  func.func @transform_0(%arg0: i32) -> (i32, i32, i32) {
    %c0_i32 = arith.constant 0 : i32
    %c0_i32_0 = arith.constant 0 : i32
    %c0_i32_1 = arith.constant 0 : i32
    return %arg0, %c0_i32, %c0_i32_0 : i32, i32, i32
  }
  func.func @transform_1(%arg0: i32) -> (i32, i32) {
    %c0_i32 = arith.constant 0 : i32
    %c0_i32_0 = arith.constant 0 : i32
    %c0_i32_1 = arith.constant 0 : i32
    return %c0_i32, %c0_i32_0 : i32, i32
  }
  func.func @transform_2(%arg0: i32) -> (i32, i32) {
    %c0_i32 = arith.constant 0 : i32
    %c0_i32_0 = arith.constant 0 : i32
    %c0_i32_1 = arith.constant 0 : i32
    return %c0_i32, %c0_i32_0 : i32, i32
  }
  func.func @transform_3(%arg0: i32) -> (i32, i32) {
    %c0_i32 = arith.constant 0 : i32
    %c0_i32_0 = arith.constant 0 : i32
    %c0_i32_1 = arith.constant 0 : i32
    return %c0_i32, %c0_i32_0 : i32, i32
  }
  func.func @transform_4(%arg0: i32) -> (i32, i32, i32) {
    %c0_i32 = arith.constant 0 : i32
    %c0_i32_0 = arith.constant 0 : i32
    %c0_i32_1 = arith.constant 0 : i32
    return %arg0, %c0_i32, %c0_i32_0 : i32, i32, i32
  }
}

</mosaic_0001>

<llo_original>
// kernel: gru_forward.2
$region0: #{gru_forward.2}
  #allocation0 [shape = 'u32[]', space=smem, size = 0x4, offset = 0x4, fixed_abs, tag = 'smem constant byte address 0x4 - core index']
  #allocation1 [shape = 'u32[144,128]{1,0:T(1,128)}', space=vmem, size = 0x12000, scoped, tag = 'internal scratch']
  #allocation2 [shape = 'f32[8,128]{1,0:T(8,128)}', space=vmem, size = 0x1000, scoped, tag = 'scratch operand']
  %s0 = inlined_call_operand.vmem [shape: f32[8,8,384], index: 0, kind: input, shape index: {}]
  %s1 = inlined_call_operand.vmem [shape: f32[8,128], index: 1, kind: input, shape index: {}]
  %s2 = inlined_call_operand.vmem [shape: f32[128,384], index: 2, kind: input, shape index: {}]
  %s3 = inlined_call_operand.vmem [shape: f32[1,384], index: 3, kind: input, shape index: {}]
  %s4 = inlined_call_operand.vmem [shape: f32[8,8,128], index: 4, kind: output, shape index: {}]
  %s5 = sld [smem:[#allocation0]]
  $region30: #{gru_forward.2} parent=0
    _
  %s7 = ssub.s32 1, %s5
  %s8 = scalar_select 0, %s7, %s5
  // Predicated region
  $region2: #{gru_forward.2} parent=0 // pred_check
    _
  $region3: #{gru_forward.2} parent=0 // pred_check_branch
    %10 = sbr.rel (0) target = $region5
  $region4: #{gru_forward.2} parent=0 // pred_region
    _
  $region5: #{gru_forward.2} parent=0 // pred_fallthru
    _
  // Predicated region
  $region6: #{gru_forward.2} parent=0 // pred_check
    _
  $region7: #{gru_forward.2} parent=0 // pred_check_branch
    %12 = sbr.rel (0) target = $region9
  $region8: #{gru_forward.2} parent=0 // pred_region
    _
  $region9: #{gru_forward.2} parent=0 // pred_fallthru
    _
  // Predicated region
  $region10: #{gru_forward.2} parent=0 // pred_check
    _
  $region11: #{gru_forward.2} parent=0 // pred_check_branch
    %14 = sbr.rel (0) target = $region13
  $region12: #{gru_forward.2} parent=0 // pred_region
    _
  $region13: #{gru_forward.2} parent=0 // pred_fallthru
    _
  // Predicated region
  $region14: #{gru_forward.2} parent=0 // pred_check
    _
  $region15: #{gru_forward.2} parent=0 // pred_check_branch
    %16 = sbr.rel (0) target = $region17
  $region16: #{gru_forward.2} parent=0 // pred_region
    _
  $region17: #{gru_forward.2} parent=0 // pred_fallthru
    _
  %p17 = scmp.eq.s32.totalorder 0, 0
  // Predicated region
  $region18: #{gru_forward.2} parent=0 // pred_check
    %p18 = pneg %p17
  $region19: #{gru_forward.2} parent=0 // pred_check_branch
    %20 = sbr.rel (%p18) target = $region21
  $region20: #{gru_forward.2} parent=0 // pred_region
    %v21 = vld [vmem:[%s1] sm:$0xff]
    %22 = vst [vmem:[#allocation2] sm:$0xff] %v21
  $region21: #{gru_forward.2} parent=0 // pred_fallthru
    _
  %v23 = vld [vmem:[%s2] sm:$0xff]
  %v24 = vld [vmem:[%s2 + $0x8] sm:$0xff]
  %v25 = vld [vmem:[%s2 + $0x10] sm:$0xff]
  %v26 = vld [vmem:[%s2 + $0x18] sm:$0xff]
  %v27 = vld [vmem:[%s2 + $0x20] sm:$0xff]
  %v28 = vld [vmem:[%s2 + $0x28] sm:$0xff]
  %v29 = vld [vmem:[%s2 + $0x30] sm:$0xff]
  %v30 = vld [vmem:[%s2 + $0x38] sm:$0xff]
  %v31 = vld [vmem:[%s2 + $0x40] sm:$0xff]
  %v32 = vld [vmem:[%s2 + $0x48] sm:$0xff]
  %v33 = vld [vmem:[%s2 + $0x50] sm:$0xff]
  %v34 = vld [vmem:[%s2 + $0x58] sm:$0xff]
  %v35 = vld [vmem:[%s2 + $0x60] sm:$0xff]
  %v36 = vld [vmem:[%s2 + $0x68] sm:$0xff]
  %v37 = vld [vmem:[%s2 + $0x70] sm:$0xff]
  %v38 = vld [vmem:[%s2 + $0x78] sm:$0xff]
  %v39 = vld [vmem:[%s2 + $0x80] sm:$0xff]
  %v40 = vld [vmem:[%s2 + $0x88] sm:$0xff]
  %v41 = vld [vmem:[%s2 + $0x90] sm:$0xff]
  %v42 = vld [vmem:[%s2 + $0x98] sm:$0xff]
  %v43 = vld [vmem:[%s2 + $0xa0] sm:$0xff]
  %v44 = vld [vmem:[%s2 + $0xa8] sm:$0xff]
  %v45 = vld [vmem:[%s2 + $0xb0] sm:$0xff]
  %v46 = vld [vmem:[%s2 + $0xb8] sm:$0xff]
  %v47 = vld [vmem:[%s2 + $0xc0] sm:$0xff]
  %v48 = vld [vmem:[%s2 + $0xc8] sm:$0xff]
  %v49 = vld [vmem:[%s2 + $0xd0] sm:$0xff]
  %v50 = vld [vmem:[%s2 + $0xd8] sm:$0xff]
  %v51 = vld [vmem:[%s2 + $0xe0] sm:$0xff]
  %v52 = vld [vmem:[%s2 + $0xe8] sm:$0xff]
  %v53 = vld [vmem:[%s2 + $0xf0] sm:$0xff]
  %v54 = vld [vmem:[%s2 + $0xf8] sm:$0xff]
  %v55 = vld [vmem:[%s2 + $0x100] sm:$0xff]
  %v56 = vld [vmem:[%s2 + $0x108] sm:$0xff]
  %v57 = vld [vmem:[%s2 + $0x110] sm:$0xff]
  %v58 = vld [vmem:[%s2 + $0x118] sm:$0xff]
  %v59 = vld [vmem:[%s2 + $0x120] sm:$0xff]
  %v60 = vld [vmem:[%s2 + $0x128] sm:$0xff]
  %v61 = vld [vmem:[%s2 + $0x130] sm:$0xff]
  %v62 = vld [vmem:[%s2 + $0x138] sm:$0xff]
  %v63 = vld [vmem:[%s2 + $0x140] sm:$0xff]
  %v64 = vld [vmem:[%s2 + $0x148] sm:$0xff]
  %v65 = vld [vmem:[%s2 + $0x150] sm:$0xff]
  %v66 = vld [vmem:[%s2 + $0x158] sm:$0xff]
  %v67 = vld [vmem:[%s2 + $0x160] sm:$0xff]
  %v68 = vld [vmem:[%s2 + $0x168] sm:$0xff]
  %v69 = vld [vmem:[%s2 + $0x170] sm:$0xff]
  %v70 = vld [vmem:[%s2 + $0x178] sm:$0xff]
  %v71 = vld [vmem:[%s3] sm:$0x7]
  %v73 = vlaneseq
  %v74 = vshrl.u32 %v73, 7
  %v75 = vsub.s32 0, %v74
  %v76 = vrot.slane %v71, %v75
  %v77 = vlaneseq
  %v78 = vshrl.u32 %v77, 7
  %v79 = vsub.s32 1, %v78
  %v80 = vrot.slane %v71, %v79
  %v81 = vlaneseq
  %v82 = vshrl.u32 %v81, 7
  %v83 = vsub.s32 2, %v82
  %v84 = vrot.slane %v71, %v83
  %v88 = vld [vmem:[#allocation2] sm:$0xff]
  %v89 = vld [vmem:[%s0] sm:$0xff]
  %v90 = vld [vmem:[%s0 + $0x8] sm:$0xff]
  %v91 = vld [vmem:[%s0 + $0x10] sm:$0xff]
  %92 = vmatprep.subr.mxu0 %v69
  %93 = vmatpush1.msra.mxu0 %v68
  %94 = vmatprep.subr.mxu0 %v66
  %95 = vmatpush1.msra.mxu0 %v65
  %96 = vmatprep.subr.mxu0 %v63
  %97 = vmatpush1.msra.mxu0 %v62
  %98 = vmatprep.subr.mxu0 %v60
  %99 = vmatpush1.msra.mxu0 %v59
  %100 = vmatprep.subr.mxu0 %v57
  %101 = vmatpush1.msra.mxu0 %v56
  %102 = vmatprep.subr.mxu0 %v54
  %103 = vmatpush1.msra.mxu0 %v53
  %104 = vmatprep.subr.mxu0 %v51
  %105 = vmatpush1.msra.mxu0 %v50
  %106 = vmatprep.subr.mxu0 %v48
  %107 = vmatpush1.msra.mxu0 %v47
  %108 = vmatprep.subr.mxu0 %v45
  %109 = vmatpush1.msra.mxu0 %v44
  %110 = vmatprep.subr.mxu0 %v42
  %111 = vmatpush1.msra.mxu0 %v41
  %112 = vmatprep.subr.mxu0 %v39
  %113 = vmatpush1.msra.mxu0 %v38
  %114 = vmatprep.subr.mxu0 %v36
  %115 = vmatpush1.msra.mxu0 %v35
  %116 = vmatprep.subr.mxu0 %v33
  %117 = vmatpush1.msra.mxu0 %v32
  %118 = vmatprep.subr.mxu0 %v30
  %119 = vmatpush1.msra.mxu0 %v29
  %120 = vmatprep.subr.mxu0 %v27
  %121 = vmatpush1.msra.mxu0 %v26
  %122 = vmatprep.subr.mxu0 %v24
  %123 = vmatpush1.msra.mxu0 %v23
  %124 = vmatprep.subr.mxu0 0.0
  %125 = vmatpush2.msra.mxu0 0.0
  %126 = vmatprep.subr.mxu0 0.0
  %127 = vmatpush2.msra.mxu0 0.0
  %128 = vmatprep.subr.mxu0 0.0
  %129 = vmatpush2.msra.mxu0 0.0
  %130 = vmatprep.subr.mxu0 0.0
  %131 = vmatpush2.msra.mxu0 0.0
  %132 = vmatprep.subr.mxu0 0.0
  %133 = vmatpush2.msra.mxu0 0.0
  %134 = vmatprep.subr.mxu0 0.0
  %135 = vmatpush2.msra.mxu0 0.0
  %136 = vmatprep.subr.mxu0 0.0
  %137 = vmatpush2.msra.mxu0 0.0
  %138 = vmatprep.subr.mxu0 0.0
  %139 = vmatpush2.msra.mxu0 0.0
  %140 = vmatprep.subr.mxu0 0.0
  %141 = vmatpush2.msra.mxu0 0.0
  %142 = vmatprep.subr.mxu0 0.0
  %143 = vmatpush2.msra.mxu0 0.0
  %144 = vmatprep.subr.mxu0 0.0
  %145 = vmatpush2.msra.mxu0 0.0
  %146 = vmatprep.subr.mxu0 0.0
  %147 = vmatpush2.msra.mxu0 0.0
  %148 = vmatprep.subr.mxu0 0.0
  %149 = vmatpush2.msra.mxu0 0.0
  %150 = vmatprep.subr.mxu0 0.0
  %151 = vmatpush2.msra.mxu0 0.0
  %152 = vmatprep.subr.mxu0 0.0
  %153 = vmatpush2.msra.mxu0 0.0
  %154 = vmatprep.subr.mxu0 0.0
  %155 = vmatpush2.msra.mxu0 0.0
  %156 = vmatprep.mubr.f32.mxu0 0.0
  %157 = vmatmul.mubr.f32.gmra.mxu0 %v88
  %v158 = vpop.f32.mrf.mxu0
  %v159 = vadd.f32 %v76, %v158
  %v160 = vpop.f32.mrf.mxu0
  %v161 = vadd.f32 %v80, %v160
  %162 = vdwg.mxu0
  %163 = vmatprep.subr.mxu0 0.0
  %164 = vmatpush1.msra.mxu0 %v70
  %165 = vmatprep.subr.mxu0 0.0
  %166 = vmatpush1.msra.mxu0 %v67
  %167 = vmatprep.subr.mxu0 0.0
  %168 = vmatpush1.msra.mxu0 %v64
  %169 = vmatprep.subr.mxu0 0.0
  %170 = vmatpush1.msra.mxu0 %v61
  %171 = vmatprep.subr.mxu0 0.0
  %172 = vmatpush1.msra.mxu0 %v58
  %173 = vmatprep.subr.mxu0 0.0
  %174 = vmatpush1.msra.mxu0 %v55
  %175 = vmatprep.subr.mxu0 0.0
  %176 = vmatpush1.msra.mxu0 %v52
  %177 = vmatprep.subr.mxu0 0.0
  %178 = vmatpush1.msra.mxu0 %v49
  %179 = vmatprep.subr.mxu0 0.0
  %180 = vmatpush1.msra.mxu0 %v46
  %181 = vmatprep.subr.mxu0 0.0
  %182 = vmatpush1.msra.mxu0 %v43
  %183 = vmatprep.subr.mxu0 0.0
  %184 = vmatpush1.msra.mxu0 %v40
  %185 = vmatprep.subr.mxu0 0.0
  %186 = vmatpush1.msra.mxu0 %v37
  %187 = vmatprep.subr.mxu0 0.0
  %188 = vmatpush1.msra.mxu0 %v34
  %189 = vmatprep.subr.mxu0 0.0
  %190 = vmatpush1.msra.mxu0 %v31
  %191 = vmatprep.subr.mxu0 0.0
  %192 = vmatpush1.msra.mxu0 %v28
  %193 = vmatprep.subr.mxu0 0.0
  %194 = vmatpush1.msra.mxu0 %v25
  %195 = vmatprep.subr.mxu0 0.0
  %196 = vmatpush2.msra.mxu0 0.0
  %197 = vmatprep.subr.mxu0 0.0
  %198 = vmatpush2.msra.mxu0 0.0
  %199 = vmatprep.subr.mxu0 0.0
  %200 = vmatpush2.msra.mxu0 0.0
  %201 = vmatprep.subr.mxu0 0.0
  %202 = vmatpush2.msra.mxu0 0.0
  %203 = vmatprep.subr.mxu0 0.0
  %204 = vmatpush2.msra.mxu0 0.0
  %205 = vmatprep.subr.mxu0 0.0
  %206 = vmatpush2.msra.mxu0 0.0
  %207 = vmatprep.subr.mxu0 0.0
  %208 = vmatpush2.msra.mxu0 0.0
  %209 = vmatprep.subr.mxu0 0.0
  %210 = vmatpush2.msra.mxu0 0.0
  %211 = vmatprep.subr.mxu0 0.0
  %212 = vmatpush2.msra.mxu0 0.0
  %213 = vmatprep.subr.mxu0 0.0
  %214 = vmatpush2.msra.mxu0 0.0
  %215 = vmatprep.subr.mxu0 0.0
  %216 = vmatpush2.msra.mxu0 0.0
  %217 = vmatprep.subr.mxu0 0.0
  %218 = vmatpush2.msra.mxu0 0.0
  %219 = vmatprep.subr.mxu0 0.0
  %220 = vmatpush2.msra.mxu0 0.0
  %221 = vmatprep.subr.mxu0 0.0
  %222 = vmatpush2.msra.mxu0 0.0
  %223 = vmatprep.subr.mxu0 0.0
  %224 = vmatpush2.msra.mxu0 0.0
  %225 = vmatprep.subr.mxu0 0.0
  %226 = vmatpush2.msra.mxu0 0.0
  %227 = vmatprep.mubr.f32.mxu0 0.0
  %228 = vmatmul.mubr.f32.gmra.mxu0 %v88
  %v229 = vpop.f32.mrf.mxu0
  %v230 = vadd.f32 %v84, %v229
  %v231 = vpop.f32.mrf.mxu0
  %232 = vdwg.mxu0
  %v233 = vadd.f32 %v89, %v159
  %v234 = vxor.u32 %v233, 2147483648
  %v235 = vmul.f32 %v234, 1.442695
  %v236 = vpow.pop %v235
  %v237 = vadd.f32 %v236, 1.0
  %v238 = vrcp.pop %v237
  %v239 = vmul.f32 1.0, %v238
  %v240 = vadd.f32 %v90, %v161
  %v241 = vxor.u32 %v240, 2147483648
  %v242 = vmul.f32 %v241, 1.442695
  %v243 = vpow.pop %v242
  %v244 = vadd.f32 %v243, 1.0
  %v245 = vrcp.pop %v244
  %v246 = vmul.f32 1.0, %v245
  %v247 = vmul.f32 %v239, %v230
  %v248 = vadd.f32 %v91, %v247
  %v249 = vtanh.pop %v248
  %v250 = vsub.f32 1.0, %v246
  %v251 = vmul.f32 %v250, %v249
  %v252 = vmul.f32 %v246, %v88
  %v253 = vadd.f32 %v251, %v252
  %254 = vst [vmem:[%s4] sm:$0xff] %v253
  %s255 = scalar_lea.vmem %s0, 24
  %v256 = vld [vmem:[%s255] sm:$0xff]
  %v257 = vld [vmem:[%s255 + $0x8] sm:$0xff]
  %v258 = vld [vmem:[%s255 + $0x10] sm:$0xff]
  %259 = vmatprep.subr.mxu0 %v69
  %260 = vmatpush1.msra.mxu0 %v68
  %261 = vmatprep.subr.mxu0 %v66
  %262 = vmatpush1.msra.mxu0 %v65
  %263 = vmatprep.subr.mxu0 %v63
  %264 = vmatpush1.msra.mxu0 %v62
  %265 = vmatprep.subr.mxu0 %v60
  %266 = vmatpush1.msra.mxu0 %v59
  %267 = vmatprep.subr.mxu0 %v57
  %268 = vmatpush1.msra.mxu0 %v56
  %269 = vmatprep.subr.mxu0 %v54
  %270 = vmatpush1.msra.mxu0 %v53
  %271 = vmatprep.subr.mxu0 %v51
  %272 = vmatpush1.msra.mxu0 %v50
  %273 = vmatprep.subr.mxu0 %v48
  %274 = vmatpush1.msra.mxu0 %v47
  %275 = vmatprep.subr.mxu0 %v45
  %276 = vmatpush1.msra.mxu0 %v44
  %277 = vmatprep.subr.mxu0 %v42
  %278 = vmatpush1.msra.mxu0 %v41
  %279 = vmatprep.subr.mxu0 %v39
  %280 = vmatpush1.msra.mxu0 %v38
  %281 = vmatprep.subr.mxu0 %v36
  %282 = vmatpush1.msra.mxu0 %v35
  %283 = vmatprep.subr.mxu0 %v33
  %284 = vmatpush1.msra.mxu0 %v32
  %285 = vmatprep.subr.mxu0 %v30
  %286 = vmatpush1.msra.mxu0 %v29
  %287 = vmatprep.subr.mxu0 %v27
  %288 = vmatpush1.msra.mxu0 %v26
  %289 = vmatprep.subr.mxu0 %v24
  %290 = vmatpush1.msra.mxu0 %v23
  %291 = vmatprep.subr.mxu0 0.0
  %292 = vmatpush2.msra.mxu0 0.0
  %293 = vmatprep.subr.mxu0 0.0
  %294 = vmatpush2.msra.mxu0 0.0
  %295 = vmatprep.subr.mxu0 0.0
  %296 = vmatpush2.msra.mxu0 0.0
  %297 = vmatprep.subr.mxu0 0.0
  %298 = vmatpush2.msra.mxu0 0.0
  %299 = vmatprep.subr.mxu0 0.0
  %300 = vmatpush2.msra.mxu0 0.0
  %301 = vmatprep.subr.mxu0 0.0
  %302 = vmatpush2.msra.mxu0 0.0
  %303 = vmatprep.subr.mxu0 0.0
  %304 = vmatpush2.msra.mxu0 0.0
  %305 = vmatprep.subr.mxu0 0.0
  %306 = vmatpush2.msra.mxu0 0.0
  %307 = vmatprep.subr.mxu0 0.0
  %308 = vmatpush2.msra.mxu0 0.0
  %309 = vmatprep.subr.mxu0 0.0
  %310 = vmatpush2.msra.mxu0 0.0
  %311 = vmatprep.subr.mxu0 0.0
  %312 = vmatpush2.msra.mxu0 0.0
  %313 = vmatprep.subr.mxu0 0.0
  %314 = vmatpush2.msra.mxu0 0.0
  %315 = vmatprep.subr.mxu0 0.0
  %316 = vmatpush2.msra.mxu0 0.0
  %317 = vmatprep.subr.mxu0 0.0
  %318 = vmatpush2.msra.mxu0 0.0
  %319 = vmatprep.subr.mxu0 0.0
  %320 = vmatpush2.msra.mxu0 0.0
  %321 = vmatprep.subr.mxu0 0.0
  %322 = vmatpush2.msra.mxu0 0.0
  %323 = vmatprep.mubr.f32.mxu0 0.0
  %324 = vmatmul.mubr.f32.gmra.mxu0 %v253
  %v325 = vpop.f32.mrf.mxu0
  %v326 = vadd.f32 %v76, %v325
  %v327 = vpop.f32.mrf.mxu0
  %v328 = vadd.f32 %v80, %v327
  %329 = vdwg.mxu0
  %330 = vmatprep.subr.mxu0 0.0
  %331 = vmatpush1.msra.mxu0 %v70
  %332 = vmatprep.subr.mxu0 0.0
  %333 = vmatpush1.msra.mxu0 %v67
  %334 = vmatprep.subr.mxu0 0.0
  %335 = vmatpush1.msra.mxu0 %v64
  %336 = vmatprep.subr.mxu0 0.0
  %337 = vmatpush1.msra.mxu0 %v61
  %338 = vmatprep.subr.mxu0 0.0
  %339 = vmatpush1.msra.mxu0 %v58
  %340 = vmatprep.subr.mxu0 0.0
  %341 = vmatpush1.msra.mxu0 %v55
  %342 = vmatprep.subr.mxu0 0.0
  %343 = vmatpush1.msra.mxu0 %v52
  %344 = vmatprep.subr.mxu0 0.0
  %345 = vmatpush1.msra.mxu0 %v49
  %346 = vmatprep.subr.mxu0 0.0
  %347 = vmatpush1.msra.mxu0 %v46
  %348 = vmatprep.subr.mxu0 0.0
  %349 = vmatpush1.msra.mxu0 %v43
  %350 = vmatprep.subr.mxu0 0.0
  %351 = vmatpush1.msra.mxu0 %v40
  %352 = vmatprep.subr.mxu0 0.0
  %353 = vmatpush1.msra.mxu0 %v37
  %354 = vmatprep.subr.mxu0 0.0
  %355 = vmatpush1.msra.mxu0 %v34
  %356 = vmatprep.subr.mxu0 0.0
  %357 = vmatpush1.msra.mxu0 %v31
  %358 = vmatprep.subr.mxu0 0.0
  %359 = vmatpush1.msra.mxu0 %v28
  %360 = vmatprep.subr.mxu0 0.0
  %361 = vmatpush1.msra.mxu0 %v25
  %362 = vmatprep.subr.mxu0 0.0
  %363 = vmatpush2.msra.mxu0 0.0
  %364 = vmatprep.subr.mxu0 0.0
  %365 = vmatpush2.msra.mxu0 0.0
  %366 = vmatprep.subr.mxu0 0.0
  %367 = vmatpush2.msra.mxu0 0.0
  %368 = vmatprep.subr.mxu0 0.0
  %369 = vmatpush2.msra.mxu0 0.0
  %370 = vmatprep.subr.mxu0 0.0
  %371 = vmatpush2.msra.mxu0 0.0
  %372 = vmatprep.subr.mxu0 0.0
  %373 = vmatpush2.msra.mxu0 0.0
  %374 = vmatprep.subr.mxu0 0.0
  %375 = vmatpush2.msra.mxu0 0.0
  %376 = vmatprep.subr.mxu0 0.0
  %377 = vmatpush2.msra.mxu0 0.0
  %378 = vmatprep.subr.mxu0 0.0
  %379 = vmatpush2.msra.mxu0 0.0
  %380 = vmatprep.subr.mxu0 0.0
  %381 = vmatpush2.msra.mxu0 0.0
  %382 = vmatprep.subr.mxu0 0.0
  %383 = vmatpush2.msra.mxu0 0.0
  %384 = vmatprep.subr.mxu0 0.0
  %385 = vmatpush2.msra.mxu0 0.0
  %386 = vmatprep.subr.mxu0 0.0
  %387 = vmatpush2.msra.mxu0 0.0
  %388 = vmatprep.subr.mxu0 0.0
  %389 = vmatpush2.msra.mxu0 0.0
  %390 = vmatprep.subr.mxu0 0.0
  %391 = vmatpush2.msra.mxu0 0.0
  %392 = vmatprep.subr.mxu0 0.0
  %393 = vmatpush2.msra.mxu0 0.0
  %394 = vmatprep.mubr.f32.mxu0 0.0
  %395 = vmatmul.mubr.f32.gmra.mxu0 %v253
  %v396 = vpop.f32.mrf.mxu0
  %v397 = vadd.f32 %v84, %v396
  %v398 = vpop.f32.mrf.mxu0
  %399 = vdwg.mxu0
  %v400 = vadd.f32 %v256, %v326
  %v401 = vxor.u32 %v400, 2147483648
  %v402 = vmul.f32 %v401, 1.442695
  %v403 = vpow.pop %v402
  %v404 = vadd.f32 %v403, 1.0
  %v405 = vrcp.pop %v404
  %v406 = vmul.f32 1.0, %v405
  %v407 = vadd.f32 %v257, %v328
  %v408 = vxor.u32 %v407, 2147483648
  %v409 = vmul.f32 %v408, 1.442695
  %v410 = vpow.pop %v409
  %v411 = vadd.f32 %v410, 1.0
  %v412 = vrcp.pop %v411
  %v413 = vmul.f32 1.0, %v412
  %v414 = vmul.f32 %v406, %v397
  %v415 = vadd.f32 %v258, %v414
  %v416 = vtanh.pop %v415
  %v417 = vsub.f32 1.0, %v413
  %v418 = vmul.f32 %v417, %v416
  %v419 = vmul.f32 %v413, %v253
  %v420 = vadd.f32 %v418, %v419
  %s421 = scalar_lea.vmem %s4, 8
  %422 = vst [vmem:[%s421] sm:$0xff] %v420
  %s423 = scalar_lea.vmem %s0, 48
  %v424 = vld [vmem:[%s423] sm:$0xff]
  %v425 = vld [vmem:[%s423 + $0x8] sm:$0xff]
  %v426 = vld [vmem:[%s423 + $0x10] sm:$0xff]
  %427 = vmatprep.subr.mxu0 %v69
  %428 = vmatpush1.msra.mxu0 %v68
  %429 = vmatprep.subr.mxu0 %v66
  %430 = vmatpush1.msra.mxu0 %v65
  %431 = vmatprep.subr.mxu0 %v63
  %432 = vmatpush1.msra.mxu0 %v62
  %433 = vmatprep.subr.mxu0 %v60
  %434 = vmatpush1.msra.mxu0 %v59
  %435 = vmatprep.subr.mxu0 %v57
  %436 = vmatpush1.msra.mxu0 %v56
  %437 = vmatprep.subr.mxu0 %v54
  %438 = vmatpush1.msra.mxu0 %v53
  %439 = vmatprep.subr.mxu0 %v51
  %440 = vmatpush1.msra.mxu0 %v50
  %441 = vmatprep.subr.mxu0 %v48
  %442 = vmatpush1.msra.mxu0 %v47
  %443 = vmatprep.subr.mxu0 %v45
  %444 = vmatpush1.msra.mxu0 %v44
  %445 = vmatprep.subr.mxu0 %v42
  %446 = vmatpush1.msra.mxu0 %v41
  %447 = vmatprep.subr.mxu0 %v39
  %448 = vmatpush1.msra.mxu0 %v38
  %449 = vmatprep.subr.mxu0 %v36
  %450 = vmatpush1.msra.mxu0 %v35
  %451 = vmatprep.subr.mxu0 %v33
  %452 = vmatpush1.msra.mxu0 %v32
  %453 = vmatprep.subr.mxu0 %v30
  %454 = vmatpush1.msra.mxu0 %v29
  %455 = vmatprep.subr.mxu0 %v27
  %456 = vmatpush1.msra.mxu0 %v26
  %457 = vmatprep.subr.mxu0 %v24
  %458 = vmatpush1.msra.mxu0 %v23
  %459 = vmatprep.subr.mxu0 0.0
  %460 = vmatpush2.msra.mxu0 0.0
  %461 = vmatprep.subr.mxu0 0.0
  %462 = vmatpush2.msra.mxu0 0.0
  %463 = vmatprep.subr.mxu0 0.0
  %464 = vmatpush2.msra.mxu0 0.0
  %465 = vmatprep.subr.mxu0 0.0
  %466 = vmatpush2.msra.mxu0 0.0
  %467 = vmatprep.subr.mxu0 0.0
  %468 = vmatpush2.msra.mxu0 0.0
  %469 = vmatprep.subr.mxu0 0.0
  %470 = vmatpush2.msra.mxu0 0.0
  %471 = vmatprep.subr.mxu0 0.0
  %472 = vmatpush2.msra.mxu0 0.0
  %473 = vmatprep.subr.mxu0 0.0
  %474 = vmatpush2.msra.mxu0 0.0
  %475 = vmatprep.subr.mxu0 0.0
  %476 = vmatpush2.msra.mxu0 0.0
  %477 = vmatprep.subr.mxu0 0.0
  %478 = vmatpush2.msra.mxu0 0.0
  %479 = vmatprep.subr.mxu0 0.0
  %480 = vmatpush2.msra.mxu0 0.0
  %481 = vmatprep.subr.mxu0 0.0
  %482 = vmatpush2.msra.mxu0 0.0
  %483 = vmatprep.subr.mxu0 0.0
  %484 = vmatpush2.msra.mxu0 0.0
  %485 = vmatprep.subr.mxu0 0.0
  %486 = vmatpush2.msra.mxu0 0.0
  %487 = vmatprep.subr.mxu0 0.0
  %488 = vmatpush2.msra.mxu0 0.0
  %489 = vmatprep.subr.mxu0 0.0
  %490 = vmatpush2.msra.mxu0 0.0
  %491 = vmatprep.mubr.f32.mxu0 0.0
  %492 = vmatmul.mubr.f32.gmra.mxu0 %v420
  %v493 = vpop.f32.mrf.mxu0
  %v494 = vadd.f32 %v76, %v493
  %v495 = vpop.f32.mrf.mxu0
  %v496 = vadd.f32 %v80, %v495
  %497 = vdwg.mxu0
  %498 = vmatprep.subr.mxu0 0.0
  %499 = vmatpush1.msra.mxu0 %v70
  %500 = vmatprep.subr.mxu0 0.0
  %501 = vmatpush1.msra.mxu0 %v67
  %502 = vmatprep.subr.mxu0 0.0
  %503 = vmatpush1.msra.mxu0 %v64
  %504 = vmatprep.subr.mxu0 0.0
  %505 = vmatpush1.msra.mxu0 %v61
  %506 = vmatprep.subr.mxu0 0.0
  %507 = vmatpush1.msra.mxu0 %v58
  %508 = vmatprep.subr.mxu0 0.0
  %509 = vmatpush1.msra.mxu0 %v55
  %510 = vmatprep.subr.mxu0 0.0
  %511 = vmatpush1.msra.mxu0 %v52
  %512 = vmatprep.subr.mxu0 0.0
  %513 = vmatpush1.msra.mxu0 %v49
  %514 = vmatprep.subr.mxu0 0.0
  %515 = vmatpush1.msra.mxu0 %v46
  %516 = vmatprep.subr.mxu0 0.0
  %517 = vmatpush1.msra.mxu0 %v43
  %518 = vmatprep.subr.mxu0 0.0
  %519 = vmatpush1.msra.mxu0 %v40
  %520 = vmatprep.subr.mxu0 0.0
  %521 = vmatpush1.msra.mxu0 %v37
  %522 = vmatprep.subr.mxu0 0.0
  %523 = vmatpush1.msra.mxu0 %v34
  %524 = vmatprep.subr.mxu0 0.0
  %525 = vmatpush1.msra.mxu0 %v31
  %526 = vmatprep.subr.mxu0 0.0
  %527 = vmatpush1.msra.mxu0 %v28
  %528 = vmatprep.subr.mxu0 0.0
  %529 = vmatpush1.msra.mxu0 %v25
  %530 = vmatprep.subr.mxu0 0.0
  %531 = vmatpush2.msra.mxu0 0.0
  %532 = vmatprep.subr.mxu0 0.0
  %533 = vmatpush2.msra.mxu0 0.0
  %534 = vmatprep.subr.mxu0 0.0
  %535 = vmatpush2.msra.mxu0 0.0
  %536 = vmatprep.subr.mxu0 0.0
  %537 = vmatpush2.msra.mxu0 0.0
  %538 = vmatprep.subr.mxu0 0.0
  %539 = vmatpush2.msra.mxu0 0.0
  %540 = vmatprep.subr.mxu0 0.0
  %541 = vmatpush2.msra.mxu0 0.0
  %542 = vmatprep.subr.mxu0 0.0
  %543 = vmatpush2.msra.mxu0 0.0
  %544 = vmatprep.subr.mxu0 0.0
  %545 = vmatpush2.msra.mxu0 0.0
  %546 = vmatprep.subr.mxu0 0.0
  %547 = vmatpush2.msra.mxu0 0.0
  %548 = vmatprep.subr.mxu0 0.0
  %549 = vmatpush2.msra.mxu0 0.0
  %550 = vmatprep.subr.mxu0 0.0
  %551 = vmatpush2.msra.mxu0 0.0
  %552 = vmatprep.subr.mxu0 0.0
  %553 = vmatpush2.msra.mxu0 0.0
  %554 = vmatprep.subr.mxu0 0.0
  %555 = vmatpush2.msra.mxu0 0.0
  %556 = vmatprep.subr.mxu0 0.0
  %557 = vmatpush2.msra.mxu0 0.0
  %558 = vmatprep.subr.mxu0 0.0
  %559 = vmatpush2.msra.mxu0 0.0
  %560 = vmatprep.subr.mxu0 0.0
  %561 = vmatpush2.msra.mxu0 0.0
  %562 = vmatprep.mubr.f32.mxu0 0.0
  %563 = vmatmul.mubr.f32.gmra.mxu0 %v420
  %v564 = vpop.f32.mrf.mxu0
  %v565 = vadd.f32 %v84, %v564
  %v566 = vpop.f32.mrf.mxu0
  %567 = vdwg.mxu0
  %v568 = vadd.f32 %v424, %v494
  %v569 = vxor.u32 %v568, 2147483648
  %v570 = vmul.f32 %v569, 1.442695
  %v571 = vpow.pop %v570
  %v572 = vadd.f32 %v571, 1.0
  %v573 = vrcp.pop %v572
  %v574 = vmul.f32 1.0, %v573
  %v575 = vadd.f32 %v425, %v496
  %v576 = vxor.u32 %v575, 2147483648
  %v577 = vmul.f32 %v576, 1.442695
  %v578 = vpow.pop %v577
  %v579 = vadd.f32 %v578, 1.0
  %v580 = vrcp.pop %v579
  %v581 = vmul.f32 1.0, %v580
  %v582 = vmul.f32 %v574, %v565
  %v583 = vadd.f32 %v426, %v582
  %v584 = vtanh.pop %v583
  %v585 = vsub.f32 1.0, %v581
  %v586 = vmul.f32 %v585, %v584
  %v587 = vmul.f32 %v581, %v420
  %v588 = vadd.f32 %v586, %v587
  %s589 = scalar_lea.vmem %s4, 16
  %590 = vst [vmem:[%s589] sm:$0xff] %v588
  %s591 = scalar_lea.vmem %s0, 72
  %v592 = vld [vmem:[%s591] sm:$0xff]
  %v593 = vld [vmem:[%s591 + $0x8] sm:$0xff]
  %v594 = vld [vmem:[%s591 + $0x10] sm:$0xff]
  %595 = vmatprep.subr.mxu0 %v69
  %596 = vmatpush1.msra.mxu0 %v68
  %597 = vmatprep.subr.mxu0 %v66
  %598 = vmatpush1.msra.mxu0 %v65
  %599 = vmatprep.subr.mxu0 %v63
  %600 = vmatpush1.msra.mxu0 %v62
  %601 = vmatprep.subr.mxu0 %v60
  %602 = vmatpush1.msra.mxu0 %v59
  %603 = vmatprep.subr.mxu0 %v57
  %604 = vmatpush1.msra.mxu0 %v56
  %605 = vmatprep.subr.mxu0 %v54
  %606 = vmatpush1.msra.mxu0 %v53
  %607 = vmatprep.subr.mxu0 %v51
  %608 = vmatpush1.msra.mxu0 %v50
  %609 = vmatprep.subr.mxu0 %v48
  %610 = vmatpush1.msra.mxu0 %v47
  %611 = vmatprep.subr.mxu0 %v45
  %612 = vmatpush1.msra.mxu0 %v44
  %613 = vmatprep.subr.mxu0 %v42
  %614 = vmatpush1.msra.mxu0 %v41
  %615 = vmatprep.subr.mxu0 %v39
  %616 = vmatpush1.msra.mxu0 %v38
  %617 = vmatprep.subr.mxu0 %v36
  %618 = vmatpush1.msra.mxu0 %v35
  %619 = vmatprep.subr.mxu0 %v33
  %620 = vmatpush1.msra.mxu0 %v32
  %621 = vmatprep.subr.mxu0 %v30
  %622 = vmatpush1.msra.mxu0 %v29
  %623 = vmatprep.subr.mxu0 %v27
  %624 = vmatpush1.msra.mxu0 %v26
  %625 = vmatprep.subr.mxu0 %v24
  %626 = vmatpush1.msra.mxu0 %v23
  %627 = vmatprep.subr.mxu0 0.0
  %628 = vmatpush2.msra.mxu0 0.0
  %629 = vmatprep.subr.mxu0 0.0
  %630 = vmatpush2.msra.mxu0 0.0
  %631 = vmatprep.subr.mxu0 0.0
  %632 = vmatpush2.msra.mxu0 0.0
  %633 = vmatprep.subr.mxu0 0.0
  %634 = vmatpush2.msra.mxu0 0.0
  %635 = vmatprep.subr.mxu0 0.0
  %636 = vmatpush2.msra.mxu0 0.0
  %637 = vmatprep.subr.mxu0 0.0
  %638 = vmatpush2.msra.mxu0 0.0
  %639 = vmatprep.subr.mxu0 0.0
  %640 = vmatpush2.msra.mxu0 0.0
  %641 = vmatprep.subr.mxu0 0.0
  %642 = vmatpush2.msra.mxu0 0.0
  %643 = vmatprep.subr.mxu0 0.0
  %644 = vmatpush2.msra.mxu0 0.0
  %645 = vmatprep.subr.mxu0 0.0
  %646 = vmatpush2.msra.mxu0 0.0
  %647 = vmatprep.subr.mxu0 0.0
  %648 = vmatpush2.msra.mxu0 0.0
  %649 = vmatprep.subr.mxu0 0.0
  %650 = vmatpush2.msra.mxu0 0.0
  %651 = vmatprep.subr.mxu0 0.0
  %652 = vmatpush2.msra.mxu0 0.0
  %653 = vmatprep.subr.mxu0 0.0
  %654 = vmatpush2.msra.mxu0 0.0
  %655 = vmatprep.subr.mxu0 0.0
  %656 = vmatpush2.msra.mxu0 0.0
  %657 = vmatprep.subr.mxu0 0.0
  %658 = vmatpush2.msra.mxu0 0.0
  %659 = vmatprep.mubr.f32.mxu0 0.0
  %660 = vmatmul.mubr.f32.gmra.mxu0 %v588
  %v661 = vpop.f32.mrf.mxu0
  %v662 = vadd.f32 %v76, %v661
  %v663 = vpop.f32.mrf.mxu0
  %v664 = vadd.f32 %v80, %v663
  %665 = vdwg.mxu0
  %666 = vmatprep.subr.mxu0 0.0
  %667 = vmatpush1.msra.mxu0 %v70
  %668 = vmatprep.subr.mxu0 0.0
  %669 = vmatpush1.msra.mxu0 %v67
  %670 = vmatprep.subr.mxu0 0.0
  %671 = vmatpush1.msra.mxu0 %v64
  %672 = vmatprep.subr.mxu0 0.0
  %673 = vmatpush1.msra.mxu0 %v61
  %674 = vmatprep.subr.mxu0 0.0
  %675 = vmatpush1.msra.mxu0 %v58
  %676 = vmatprep.subr.mxu0 0.0
  %677 = vmatpush1.msra.mxu0 %v55
  %678 = vmatprep.subr.mxu0 0.0
  %679 = vmatpush1.msra.mxu0 %v52
  %680 = vmatprep.subr.mxu0 0.0
  %681 = vmatpush1.msra.mxu0 %v49
  %682 = vmatprep.subr.mxu0 0.0
  %683 = vmatpush1.msra.mxu0 %v46
  %684 = vmatprep.subr.mxu0 0.0
  %685 = vmatpush1.msra.mxu0 %v43
  %686 = vmatprep.subr.mxu0 0.0
  %687 = vmatpush1.msra.mxu0 %v40
  %688 = vmatprep.subr.mxu0 0.0
  %689 = vmatpush1.msra.mxu0 %v37
  %690 = vmatprep.subr.mxu0 0.0
  %691 = vmatpush1.msra.mxu0 %v34
  %692 = vmatprep.subr.mxu0 0.0
  %693 = vmatpush1.msra.mxu0 %v31
  %694 = vmatprep.subr.mxu0 0.0
  %695 = vmatpush1.msra.mxu0 %v28
  %696 = vmatprep.subr.mxu0 0.0
  %697 = vmatpush1.msra.mxu0 %v25
  %698 = vmatprep.subr.mxu0 0.0
  %699 = vmatpush2.msra.mxu0 0.0
  %700 = vmatprep.subr.mxu0 0.0
  %701 = vmatpush2.msra.mxu0 0.0
  %702 = vmatprep.subr.mxu0 0.0
  %703 = vmatpush2.msra.mxu0 0.0
  %704 = vmatprep.subr.mxu0 0.0
  %705 = vmatpush2.msra.mxu0 0.0
  %706 = vmatprep.subr.mxu0 0.0
  %707 = vmatpush2.msra.mxu0 0.0
  %708 = vmatprep.subr.mxu0 0.0
  %709 = vmatpush2.msra.mxu0 0.0
  %710 = vmatprep.subr.mxu0 0.0
  %711 = vmatpush2.msra.mxu0 0.0
  %712 = vmatprep.subr.mxu0 0.0
  %713 = vmatpush2.msra.mxu0 0.0
  %714 = vmatprep.subr.mxu0 0.0
  %715 = vmatpush2.msra.mxu0 0.0
  %716 = vmatprep.subr.mxu0 0.0
  %717 = vmatpush2.msra.mxu0 0.0
  %718 = vmatprep.subr.mxu0 0.0
  %719 = vmatpush2.msra.mxu0 0.0
  %720 = vmatprep.subr.mxu0 0.0
  %721 = vmatpush2.msra.mxu0 0.0
  %722 = vmatprep.subr.mxu0 0.0
  %723 = vmatpush2.msra.mxu0 0.0
  %724 = vmatprep.subr.mxu0 0.0
  %725 = vmatpush2.msra.mxu0 0.0
  %726 = vmatprep.subr.mxu0 0.0
  %727 = vmatpush2.msra.mxu0 0.0
  %728 = vmatprep.subr.mxu0 0.0
  %729 = vmatpush2.msra.mxu0 0.0
  %730 = vmatprep.mubr.f32.mxu0 0.0
  %731 = vmatmul.mubr.f32.gmra.mxu0 %v588
  %v732 = vpop.f32.mrf.mxu0
  %v733 = vadd.f32 %v84, %v732
  %v734 = vpop.f32.mrf.mxu0
  %735 = vdwg.mxu0
  %v736 = vadd.f32 %v592, %v662
  %v737 = vxor.u32 %v736, 2147483648
  %v738 = vmul.f32 %v737, 1.442695
  %v739 = vpow.pop %v738
  %v740 = vadd.f32 %v739, 1.0
  %v741 = vrcp.pop %v740
  %v742 = vmul.f32 1.0, %v741
  %v743 = vadd.f32 %v593, %v664
  %v744 = vxor.u32 %v743, 2147483648
  %v745 = vmul.f32 %v744, 1.442695
  %v746 = vpow.pop %v745
  %v747 = vadd.f32 %v746, 1.0
  %v748 = vrcp.pop %v747
  %v749 = vmul.f32 1.0, %v748
  %v750 = vmul.f32 %v742, %v733
  %v751 = vadd.f32 %v594, %v750
  %v752 = vtanh.pop %v751
  %v753 = vsub.f32 1.0, %v749
  %v754 = vmul.f32 %v753, %v752
  %v755 = vmul.f32 %v749, %v588
  %v756 = vadd.f32 %v754, %v755
  %s757 = scalar_lea.vmem %s4, 24
  %758 = vst [vmem:[%s757] sm:$0xff] %v756
  %s759 = scalar_lea.vmem %s0, 96
  %v760 = vld [vmem:[%s759] sm:$0xff]
  %v761 = vld [vmem:[%s759 + $0x8] sm:$0xff]
  %v762 = vld [vmem:[%s759 + $0x10] sm:$0xff]
  %763 = vmatprep.subr.mxu0 %v69
  %764 = vmatpush1.msra.mxu0 %v68
  %765 = vmatprep.subr.mxu0 %v66
  %766 = vmatpush1.msra.mxu0 %v65
  %767 = vmatprep.subr.mxu0 %v63
  %768 = vmatpush1.msra.mxu0 %v62
  %769 = vmatprep.subr.mxu0 %v60
  %770 = vmatpush1.msra.mxu0 %v59
  %771 = vmatprep.subr.mxu0 %v57
  %772 = vmatpush1.msra.mxu0 %v56
  %773 = vmatprep.subr.mxu0 %v54
  %774 = vmatpush1.msra.mxu0 %v53
  %775 = vmatprep.subr.mxu0 %v51
  %776 = vmatpush1.msra.mxu0 %v50
  %777 = vmatprep.subr.mxu0 %v48
  %778 = vmatpush1.msra.mxu0 %v47
  %779 = vmatprep.subr.mxu0 %v45
  %780 = vmatpush1.msra.mxu0 %v44
  %781 = vmatprep.subr.mxu0 %v42
  %782 = vmatpush1.msra.mxu0 %v41
  %783 = vmatprep.subr.mxu0 %v39
  %784 = vmatpush1.msra.mxu0 %v38
  %785 = vmatprep.subr.mxu0 %v36
  %786 = vmatpush1.msra.mxu0 %v35
  %787 = vmatprep.subr.mxu0 %v33
  %788 = vmatpush1.msra.mxu0 %v32
  %789 = vmatprep.subr.mxu0 %v30
  %790 = vmatpush1.msra.mxu0 %v29
  %791 = vmatprep.subr.mxu0 %v27
  %792 = vmatpush1.msra.mxu0 %v26
  %793 = vmatprep.subr.mxu0 %v24
  %794 = vmatpush1.msra.mxu0 %v23
  %795 = vmatprep.subr.mxu0 0.0
  %796 = vmatpush2.msra.mxu0 0.0
  %797 = vmatprep.subr.mxu0 0.0
  %798 = vmatpush2.msra.mxu0 0.0
  %799 = vmatprep.subr.mxu0 0.0
  %800 = vmatpush2.msra.mxu0 0.0
  %801 = vmatprep.subr.mxu0 0.0
  %802 = vmatpush2.msra.mxu0 0.0
  %803 = vmatprep.subr.mxu0 0.0
  %804 = vmatpush2.msra.mxu0 0.0
  %805 = vmatprep.subr.mxu0 0.0
  %806 = vmatpush2.msra.mxu0 0.0
  %807 = vmatprep.subr.mxu0 0.0
  %808 = vmatpush2.msra.mxu0 0.0
  %809 = vmatprep.subr.mxu0 0.0
  %810 = vmatpush2.msra.mxu0 0.0
  %811 = vmatprep.subr.mxu0 0.0
  %812 = vmatpush2.msra.mxu0 0.0
  %813 = vmatprep.subr.mxu0 0.0
  %814 = vmatpush2.msra.mxu0 0.0
  %815 = vmatprep.subr.mxu0 0.0
  %816 = vmatpush2.msra.mxu0 0.0
  %817 = vmatprep.subr.mxu0 0.0
  %818 = vmatpush2.msra.mxu0 0.0
  %819 = vmatprep.subr.mxu0 0.0
  %820 = vmatpush2.msra.mxu0 0.0
  %821 = vmatprep.subr.mxu0 0.0
  %822 = vmatpush2.msra.mxu0 0.0
  %823 = vmatprep.subr.mxu0 0.0
  %824 = vmatpush2.msra.mxu0 0.0
  %825 = vmatprep.subr.mxu0 0.0
  %826 = vmatpush2.msra.mxu0 0.0
  %827 = vmatprep.mubr.f32.mxu0 0.0
  %828 = vmatmul.mubr.f32.gmra.mxu0 %v756
  %v829 = vpop.f32.mrf.mxu0
  %v830 = vadd.f32 %v76, %v829
  %v831 = vpop.f32.mrf.mxu0
  %v832 = vadd.f32 %v80, %v831
  %833 = vdwg.mxu0
  %834 = vmatprep.subr.mxu0 0.0
  %835 = vmatpush1.msra.mxu0 %v70
  %836 = vmatprep.subr.mxu0 0.0
  %837 = vmatpush1.msra.mxu0 %v67
  %838 = vmatprep.subr.mxu0 0.0
  %839 = vmatpush1.msra.mxu0 %v64
  %840 = vmatprep.subr.mxu0 0.0
  %841 = vmatpush1.msra.mxu0 %v61
  %842 = vmatprep.subr.mxu0 0.0
  %843 = vmatpush1.msra.mxu0 %v58
  %844 = vmatprep.subr.mxu0 0.0
  %845 = vmatpush1.msra.mxu0 %v55
  %846 = vmatprep.subr.mxu0 0.0
  %847 = vmatpush1.msra.mxu0 %v52
  %848 = vmatprep.subr.mxu0 0.0
  %849 = vmatpush1.msra.mxu0 %v49
  %850 = vmatprep.subr.mxu0 0.0
  %851 = vmatpush1.msra.mxu0 %v46
  %852 = vmatprep.subr.mxu0 0.0
  %853 = vmatpush1.msra.mxu0 %v43
  %854 = vmatprep.subr.mxu0 0.0
  %855 = vmatpush1.msra.mxu0 %v40
  %856 = vmatprep.subr.mxu0 0.0
  %857 = vmatpush1.msra.mxu0 %v37
  %858 = vmatprep.subr.mxu0 0.0
  %859 = vmatpush1.msra.mxu0 %v34
  %860 = vmatprep.subr.mxu0 0.0
  %861 = vmatpush1.msra.mxu0 %v31
  %862 = vmatprep.subr.mxu0 0.0
  %863 = vmatpush1.msra.mxu0 %v28
  %864 = vmatprep.subr.mxu0 0.0
  %865 = vmatpush1.msra.mxu0 %v25
  %866 = vmatprep.subr.mxu0 0.0
  %867 = vmatpush2.msra.mxu0 0.0
  %868 = vmatprep.subr.mxu0 0.0
  %869 = vmatpush2.msra.mxu0 0.0
  %870 = vmatprep.subr.mxu0 0.0
  %871 = vmatpush2.msra.mxu0 0.0
  %872 = vmatprep.subr.mxu0 0.0
  %873 = vmatpush2.msra.mxu0 0.0
  %874 = vmatprep.subr.mxu0 0.0
  %875 = vmatpush2.msra.mxu0 0.0
  %876 = vmatprep.subr.mxu0 0.0
  %877 = vmatpush2.msra.mxu0 0.0
  %878 = vmatprep.subr.mxu0 0.0
  %879 = vmatpush2.msra.mxu0 0.0
  %880 = vmatprep.subr.mxu0 0.0
  %881 = vmatpush2.msra.mxu0 0.0
  %882 = vmatprep.subr.mxu0 0.0
  %883 = vmatpush2.msra.mxu0 0.0
  %884 = vmatprep.subr.mxu0 0.0
  %885 = vmatpush2.msra.mxu0 0.0
  %886 = vmatprep.subr.mxu0 0.0
  %887 = vmatpush2.msra.mxu0 0.0
  %888 = vmatprep.subr.mxu0 0.0
  %889 = vmatpush2.msra.mxu0 0.0
  %890 = vmatprep.subr.mxu0 0.0
  %891 = vmatpush2.msra.mxu0 0.0
  %892 = vmatprep.subr.mxu0 0.0
  %893 = vmatpush2.msra.mxu0 0.0
  %894 = vmatprep.subr.mxu0 0.0
  %895 = vmatpush2.msra.mxu0 0.0
  %896 = vmatprep.subr.mxu0 0.0
  %897 = vmatpush2.msra.mxu0 0.0
  %898 = vmatprep.mubr.f32.mxu0 0.0
  %899 = vmatmul.mubr.f32.gmra.mxu0 %v756
  %v900 = vpop.f32.mrf.mxu0
  %v901 = vadd.f32 %v84, %v900
  %v902 = vpop.f32.mrf.mxu0
  %903 = vdwg.mxu0
  %v904 = vadd.f32 %v760, %v830
  %v905 = vxor.u32 %v904, 2147483648
  %v906 = vmul.f32 %v905, 1.442695
  %v907 = vpow.pop %v906
  %v908 = vadd.f32 %v907, 1.0
  %v909 = vrcp.pop %v908
  %v910 = vmul.f32 1.0, %v909
  %v911 = vadd.f32 %v761, %v832
  %v912 = vxor.u32 %v911, 2147483648
  %v913 = vmul.f32 %v912, 1.442695
  %v914 = vpow.pop %v913
  %v915 = vadd.f32 %v914, 1.0
  %v916 = vrcp.pop %v915
  %v917 = vmul.f32 1.0, %v916
  %v918 = vmul.f32 %v910, %v901
  %v919 = vadd.f32 %v762, %v918
  %v920 = vtanh.pop %v919
  %v921 = vsub.f32 1.0, %v917
  %v922 = vmul.f32 %v921, %v920
  %v923 = vmul.f32 %v917, %v756
  %v924 = vadd.f32 %v922, %v923
  %s925 = scalar_lea.vmem %s4, 32
  %926 = vst [vmem:[%s925] sm:$0xff] %v924
  %s927 = scalar_lea.vmem %s0, 120
  %v928 = vld [vmem:[%s927] sm:$0xff]
  %v929 = vld [vmem:[%s927 + $0x8] sm:$0xff]
  %v930 = vld [vmem:[%s927 + $0x10] sm:$0xff]
  %931 = vmatprep.subr.mxu0 %v69
  %932 = vmatpush1.msra.mxu0 %v68
  %933 = vmatprep.subr.mxu0 %v66
  %934 = vmatpush1.msra.mxu0 %v65
  %935 = vmatprep.subr.mxu0 %v63
  %936 = vmatpush1.msra.mxu0 %v62
  %937 = vmatprep.subr.mxu0 %v60
  %938 = vmatpush1.msra.mxu0 %v59
  %939 = vmatprep.subr.mxu0 %v57
  %940 = vmatpush1.msra.mxu0 %v56
  %941 = vmatprep.subr.mxu0 %v54
  %942 = vmatpush1.msra.mxu0 %v53
  %943 = vmatprep.subr.mxu0 %v51
  %944 = vmatpush1.msra.mxu0 %v50
  %945 = vmatprep.subr.mxu0 %v48
  %946 = vmatpush1.msra.mxu0 %v47
  %947 = vmatprep.subr.mxu0 %v45
  %948 = vmatpush1.msra.mxu0 %v44
  %949 = vmatprep.subr.mxu0 %v42
  %950 = vmatpush1.msra.mxu0 %v41
  %951 = vmatprep.subr.mxu0 %v39
  %952 = vmatpush1.msra.mxu0 %v38
  %953 = vmatprep.subr.mxu0 %v36
  %954 = vmatpush1.msra.mxu0 %v35
  %955 = vmatprep.subr.mxu0 %v33
  %956 = vmatpush1.msra.mxu0 %v32
  %957 = vmatprep.subr.mxu0 %v30
  %958 = vmatpush1.msra.mxu0 %v29
  %959 = vmatprep.subr.mxu0 %v27
  %960 = vmatpush1.msra.mxu0 %v26
  %961 = vmatprep.subr.mxu0 %v24
  %962 = vmatpush1.msra.mxu0 %v23
  %963 = vmatprep.subr.mxu0 0.0
  %964 = vmatpush2.msra.mxu0 0.0
  %965 = vmatprep.subr.mxu0 0.0
  %966 = vmatpush2.msra.mxu0 0.0
  %967 = vmatprep.subr.mxu0 0.0
  %968 = vmatpush2.msra.mxu0 0.0
  %969 = vmatprep.subr.mxu0 0.0
  %970 = vmatpush2.msra.mxu0 0.0
  %971 = vmatprep.subr.mxu0 0.0
  %972 = vmatpush2.msra.mxu0 0.0
  %973 = vmatprep.subr.mxu0 0.0
  %974 = vmatpush2.msra.mxu0 0.0
  %975 = vmatprep.subr.mxu0 0.0
  %976 = vmatpush2.msra.mxu0 0.0
  %977 = vmatprep.subr.mxu0 0.0
  %978 = vmatpush2.msra.mxu0 0.0
  %979 = vmatprep.subr.mxu0 0.0
  %980 = vmatpush2.msra.mxu0 0.0
  %981 = vmatprep.subr.mxu0 0.0
  %982 = vmatpush2.msra.mxu0 0.0
  %983 = vmatprep.subr.mxu0 0.0
  %984 = vmatpush2.msra.mxu0 0.0
  %985 = vmatprep.subr.mxu0 0.0
  %986 = vmatpush2.msra.mxu0 0.0
  %987 = vmatprep.subr.mxu0 0.0
  %988 = vmatpush2.msra.mxu0 0.0
  %989 = vmatprep.subr.mxu0 0.0
  %990 = vmatpush2.msra.mxu0 0.0
  %991 = vmatprep.subr.mxu0 0.0
  %992 = vmatpush2.msra.mxu0 0.0
  %993 = vmatprep.subr.mxu0 0.0
  %994 = vmatpush2.msra.mxu0 0.0
  %995 = vmatprep.mubr.f32.mxu0 0.0
  %996 = vmatmul.mubr.f32.gmra.mxu0 %v924
  %v997 = vpop.f32.mrf.mxu0
  %v998 = vadd.f32 %v76, %v997
  %v999 = vpop.f32.mrf.mxu0
  %v1000 = vadd.f32 %v80, %v999
  %1001 = vdwg.mxu0
  %1002 = vmatprep.subr.mxu0 0.0
  %1003 = vmatpush1.msra.mxu0 %v70
  %1004 = vmatprep.subr.mxu0 0.0
  %1005 = vmatpush1.msra.mxu0 %v67
  %1006 = vmatprep.subr.mxu0 0.0
  %1007 = vmatpush1.msra.mxu0 %v64
  %1008 = vmatprep.subr.mxu0 0.0
  %1009 = vmatpush1.msra.mxu0 %v61
  %1010 = vmatprep.subr.mxu0 0.0
  %1011 = vmatpush1.msra.mxu0 %v58
  %1012 = vmatprep.subr.mxu0 0.0
  %1013 = vmatpush1.msra.mxu0 %v55
  %1014 = vmatprep.subr.mxu0 0.0
  %1015 = vmatpush1.msra.mxu0 %v52
  %1016 = vmatprep.subr.mxu0 0.0
  %1017 = vmatpush1.msra.mxu0 %v49
  %1018 = vmatprep.subr.mxu0 0.0
  %1019 = vmatpush1.msra.mxu0 %v46
  %1020 = vmatprep.subr.mxu0 0.0
  %1021 = vmatpush1.msra.mxu0 %v43
  %1022 = vmatprep.subr.mxu0 0.0
  %1023 = vmatpush1.msra.mxu0 %v40
  %1024 = vmatprep.subr.mxu0 0.0
  %1025 = vmatpush1.msra.mxu0 %v37
  %1026 = vmatprep.subr.mxu0 0.0
  %1027 = vmatpush1.msra.mxu0 %v34
  %1028 = vmatprep.subr.mxu0 0.0
  %1029 = vmatpush1.msra.mxu0 %v31
  %1030 = vmatprep.subr.mxu0 0.0
  %1031 = vmatpush1.msra.mxu0 %v28
  %1032 = vmatprep.subr.mxu0 0.0
  %1033 = vmatpush1.msra.mxu0 %v25
  %1034 = vmatprep.subr.mxu0 0.0
  %1035 = vmatpush2.msra.mxu0 0.0
  %1036 = vmatprep.subr.mxu0 0.0
  %1037 = vmatpush2.msra.mxu0 0.0
  %1038 = vmatprep.subr.mxu0 0.0
  %1039 = vmatpush2.msra.mxu0 0.0
  %1040 = vmatprep.subr.mxu0 0.0
  %1041 = vmatpush2.msra.mxu0 0.0
  %1042 = vmatprep.subr.mxu0 0.0
  %1043 = vmatpush2.msra.mxu0 0.0
  %1044 = vmatprep.subr.mxu0 0.0
  %1045 = vmatpush2.msra.mxu0 0.0
  %1046 = vmatprep.subr.mxu0 0.0
  %1047 = vmatpush2.msra.mxu0 0.0
  %1048 = vmatprep.subr.mxu0 0.0
  %1049 = vmatpush2.msra.mxu0 0.0
  %1050 = vmatprep.subr.mxu0 0.0
  %1051 = vmatpush2.msra.mxu0 0.0
  %1052 = vmatprep.subr.mxu0 0.0
  %1053 = vmatpush2.msra.mxu0 0.0
  %1054 = vmatprep.subr.mxu0 0.0
  %1055 = vmatpush2.msra.mxu0 0.0
  %1056 = vmatprep.subr.mxu0 0.0
  %1057 = vmatpush2.msra.mxu0 0.0
  %1058 = vmatprep.subr.mxu0 0.0
  %1059 = vmatpush2.msra.mxu0 0.0
  %1060 = vmatprep.subr.mxu0 0.0
  %1061 = vmatpush2.msra.mxu0 0.0
  %1062 = vmatprep.subr.mxu0 0.0
  %1063 = vmatpush2.msra.mxu0 0.0
  %1064 = vmatprep.subr.mxu0 0.0
  %1065 = vmatpush2.msra.mxu0 0.0
  %1066 = vmatprep.mubr.f32.mxu0 0.0
  %1067 = vmatmul.mubr.f32.gmra.mxu0 %v924
  %v1068 = vpop.f32.mrf.mxu0
  %v1069 = vadd.f32 %v84, %v1068
  %v1070 = vpop.f32.mrf.mxu0
  %1071 = vdwg.mxu0
  %v1072 = vadd.f32 %v928, %v998
  %v1073 = vxor.u32 %v1072, 2147483648
  %v1074 = vmul.f32 %v1073, 1.442695
  %v1075 = vpow.pop %v1074
  %v1076 = vadd.f32 %v1075, 1.0
  %v1077 = vrcp.pop %v1076
  %v1078 = vmul.f32 1.0, %v1077
  %v1079 = vadd.f32 %v929, %v1000
  %v1080 = vxor.u32 %v1079, 2147483648
  %v1081 = vmul.f32 %v1080, 1.442695
  %v1082 = vpow.pop %v1081
  %v1083 = vadd.f32 %v1082, 1.0
  %v1084 = vrcp.pop %v1083
  %v1085 = vmul.f32 1.0, %v1084
  %v1086 = vmul.f32 %v1078, %v1069
  %v1087 = vadd.f32 %v930, %v1086
  %v1088 = vtanh.pop %v1087
  %v1089 = vsub.f32 1.0, %v1085
  %v1090 = vmul.f32 %v1089, %v1088
  %v1091 = vmul.f32 %v1085, %v924
  %v1092 = vadd.f32 %v1090, %v1091
  %s1093 = scalar_lea.vmem %s4, 40
  %1094 = vst [vmem:[%s1093] sm:$0xff] %v1092
  %s1095 = scalar_lea.vmem %s0, 144
  %v1096 = vld [vmem:[%s1095] sm:$0xff]
  %v1097 = vld [vmem:[%s1095 + $0x8] sm:$0xff]
  %v1098 = vld [vmem:[%s1095 + $0x10] sm:$0xff]
  %1099 = vmatprep.subr.mxu0 %v69
  %1100 = vmatpush1.msra.mxu0 %v68
  %1101 = vmatprep.subr.mxu0 %v66
  %1102 = vmatpush1.msra.mxu0 %v65
  %1103 = vmatprep.subr.mxu0 %v63
  %1104 = vmatpush1.msra.mxu0 %v62
  %1105 = vmatprep.subr.mxu0 %v60
  %1106 = vmatpush1.msra.mxu0 %v59
  %1107 = vmatprep.subr.mxu0 %v57
  %1108 = vmatpush1.msra.mxu0 %v56
  %1109 = vmatprep.subr.mxu0 %v54
  %1110 = vmatpush1.msra.mxu0 %v53
  %1111 = vmatprep.subr.mxu0 %v51
  %1112 = vmatpush1.msra.mxu0 %v50
  %1113 = vmatprep.subr.mxu0 %v48
  %1114 = vmatpush1.msra.mxu0 %v47
  %1115 = vmatprep.subr.mxu0 %v45
  %1116 = vmatpush1.msra.mxu0 %v44
  %1117 = vmatprep.subr.mxu0 %v42
  %1118 = vmatpush1.msra.mxu0 %v41
  %1119 = vmatprep.subr.mxu0 %v39
  %1120 = vmatpush1.msra.mxu0 %v38
  %1121 = vmatprep.subr.mxu0 %v36
  %1122 = vmatpush1.msra.mxu0 %v35
  %1123 = vmatprep.subr.mxu0 %v33
  %1124 = vmatpush1.msra.mxu0 %v32
  %1125 = vmatprep.subr.mxu0 %v30
  %1126 = vmatpush1.msra.mxu0 %v29
  %1127 = vmatprep.subr.mxu0 %v27
  %1128 = vmatpush1.msra.mxu0 %v26
  %1129 = vmatprep.subr.mxu0 %v24
  %1130 = vmatpush1.msra.mxu0 %v23
  %1131 = vmatprep.subr.mxu0 0.0
  %1132 = vmatpush2.msra.mxu0 0.0
  %1133 = vmatprep.subr.mxu0 0.0
  %1134 = vmatpush2.msra.mxu0 0.0
  %1135 = vmatprep.subr.mxu0 0.0
  %1136 = vmatpush2.msra.mxu0 0.0
  %1137 = vmatprep.subr.mxu0 0.0
  %1138 = vmatpush2.msra.mxu0 0.0
  %1139 = vmatprep.subr.mxu0 0.0
  %1140 = vmatpush2.msra.mxu0 0.0
  %1141 = vmatprep.subr.mxu0 0.0
  %1142 = vmatpush2.msra.mxu0 0.0
  %1143 = vmatprep.subr.mxu0 0.0
  %1144 = vmatpush2.msra.mxu0 0.0
  %1145 = vmatprep.subr.mxu0 0.0
  %1146 = vmatpush2.msra.mxu0 0.0
  %1147 = vmatprep.subr.mxu0 0.0
  %1148 = vmatpush2.msra.mxu0 0.0
  %1149 = vmatprep.subr.mxu0 0.0
  %1150 = vmatpush2.msra.mxu0 0.0
  %1151 = vmatprep.subr.mxu0 0.0
  %1152 = vmatpush2.msra.mxu0 0.0
  %1153 = vmatprep.subr.mxu0 0.0
  %1154 = vmatpush2.msra.mxu0 0.0
  %1155 = vmatprep.subr.mxu0 0.0
  %1156 = vmatpush2.msra.mxu0 0.0
  %1157 = vmatprep.subr.mxu0 0.0
  %1158 = vmatpush2.msra.mxu0 0.0
  %1159 = vmatprep.subr.mxu0 0.0
  %1160 = vmatpush2.msra.mxu0 0.0
  %1161 = vmatprep.subr.mxu0 0.0
  %1162 = vmatpush2.msra.mxu0 0.0
  %1163 = vmatprep.mubr.f32.mxu0 0.0
  %1164 = vmatmul.mubr.f32.gmra.mxu0 %v1092
  %v1165 = vpop.f32.mrf.mxu0
  %v1166 = vadd.f32 %v76, %v1165
  %v1167 = vpop.f32.mrf.mxu0
  %v1168 = vadd.f32 %v80, %v1167
  %1169 = vdwg.mxu0
  %1170 = vmatprep.subr.mxu0 0.0
  %1171 = vmatpush1.msra.mxu0 %v70
  %1172 = vmatprep.subr.mxu0 0.0
  %1173 = vmatpush1.msra.mxu0 %v67
  %1174 = vmatprep.subr.mxu0 0.0
  %1175 = vmatpush1.msra.mxu0 %v64
  %1176 = vmatprep.subr.mxu0 0.0
  %1177 = vmatpush1.msra.mxu0 %v61
  %1178 = vmatprep.subr.mxu0 0.0
  %1179 = vmatpush1.msra.mxu0 %v58
  %1180 = vmatprep.subr.mxu0 0.0
  %1181 = vmatpush1.msra.mxu0 %v55
  %1182 = vmatprep.subr.mxu0 0.0
  %1183 = vmatpush1.msra.mxu0 %v52
  %1184 = vmatprep.subr.mxu0 0.0
  %1185 = vmatpush1.msra.mxu0 %v49
  %1186 = vmatprep.subr.mxu0 0.0
  %1187 = vmatpush1.msra.mxu0 %v46
  %1188 = vmatprep.subr.mxu0 0.0
  %1189 = vmatpush1.msra.mxu0 %v43
  %1190 = vmatprep.subr.mxu0 0.0
  %1191 = vmatpush1.msra.mxu0 %v40
  %1192 = vmatprep.subr.mxu0 0.0
  %1193 = vmatpush1.msra.mxu0 %v37
  %1194 = vmatprep.subr.mxu0 0.0
  %1195 = vmatpush1.msra.mxu0 %v34
  %1196 = vmatprep.subr.mxu0 0.0
  %1197 = vmatpush1.msra.mxu0 %v31
  %1198 = vmatprep.subr.mxu0 0.0
  %1199 = vmatpush1.msra.mxu0 %v28
  %1200 = vmatprep.subr.mxu0 0.0
  %1201 = vmatpush1.msra.mxu0 %v25
  %1202 = vmatprep.subr.mxu0 0.0
  %1203 = vmatpush2.msra.mxu0 0.0
  %1204 = vmatprep.subr.mxu0 0.0
  %1205 = vmatpush2.msra.mxu0 0.0
  %1206 = vmatprep.subr.mxu0 0.0
  %1207 = vmatpush2.msra.mxu0 0.0
  %1208 = vmatprep.subr.mxu0 0.0
  %1209 = vmatpush2.msra.mxu0 0.0
  %1210 = vmatprep.subr.mxu0 0.0
  %1211 = vmatpush2.msra.mxu0 0.0
  %1212 = vmatprep.subr.mxu0 0.0
  %1213 = vmatpush2.msra.mxu0 0.0
  %1214 = vmatprep.subr.mxu0 0.0
  %1215 = vmatpush2.msra.mxu0 0.0
  %1216 = vmatprep.subr.mxu0 0.0
  %1217 = vmatpush2.msra.mxu0 0.0
  %1218 = vmatprep.subr.mxu0 0.0
  %1219 = vmatpush2.msra.mxu0 0.0
  %1220 = vmatprep.subr.mxu0 0.0
  %1221 = vmatpush2.msra.mxu0 0.0
  %1222 = vmatprep.subr.mxu0 0.0
  %1223 = vmatpush2.msra.mxu0 0.0
  %1224 = vmatprep.subr.mxu0 0.0
  %1225 = vmatpush2.msra.mxu0 0.0
  %1226 = vmatprep.subr.mxu0 0.0
  %1227 = vmatpush2.msra.mxu0 0.0
  %1228 = vmatprep.subr.mxu0 0.0
  %1229 = vmatpush2.msra.mxu0 0.0
  %1230 = vmatprep.subr.mxu0 0.0
  %1231 = vmatpush2.msra.mxu0 0.0
  %1232 = vmatprep.subr.mxu0 0.0
  %1233 = vmatpush2.msra.mxu0 0.0
  %1234 = vmatprep.mubr.f32.mxu0 0.0
  %1235 = vmatmul.mubr.f32.gmra.mxu0 %v1092
  %v1236 = vpop.f32.mrf.mxu0
  %v1237 = vadd.f32 %v84, %v1236
  %v1238 = vpop.f32.mrf.mxu0
  %1239 = vdwg.mxu0
  %v1240 = vadd.f32 %v1096, %v1166
  %v1241 = vxor.u32 %v1240, 2147483648
  %v1242 = vmul.f32 %v1241, 1.442695
  %v1243 = vpow.pop %v1242
  %v1244 = vadd.f32 %v1243, 1.0
  %v1245 = vrcp.pop %v1244
  %v1246 = vmul.f32 1.0, %v1245
  %v1247 = vadd.f32 %v1097, %v1168
  %v1248 = vxor.u32 %v1247, 2147483648
  %v1249 = vmul.f32 %v1248, 1.442695
  %v1250 = vpow.pop %v1249
  %v1251 = vadd.f32 %v1250, 1.0
  %v1252 = vrcp.pop %v1251
  %v1253 = vmul.f32 1.0, %v1252
  %v1254 = vmul.f32 %v1246, %v1237
  %v1255 = vadd.f32 %v1098, %v1254
  %v1256 = vtanh.pop %v1255
  %v1257 = vsub.f32 1.0, %v1253
  %v1258 = vmul.f32 %v1257, %v1256
  %v1259 = vmul.f32 %v1253, %v1092
  %v1260 = vadd.f32 %v1258, %v1259
  %s1261 = scalar_lea.vmem %s4, 48
  %1262 = vst [vmem:[%s1261] sm:$0xff] %v1260
  %s1263 = scalar_lea.vmem %s0, 168
  %v1264 = vld [vmem:[%s1263] sm:$0xff]
  %v1265 = vld [vmem:[%s1263 + $0x8] sm:$0xff]
  %v1266 = vld [vmem:[%s1263 + $0x10] sm:$0xff]
  %1267 = vmatprep.subr.mxu0 %v69
  %1268 = vmatpush1.msra.mxu0 %v68
  %1269 = vmatprep.subr.mxu0 %v66
  %1270 = vmatpush1.msra.mxu0 %v65
  %1271 = vmatprep.subr.mxu0 %v63
  %1272 = vmatpush1.msra.mxu0 %v62
  %1273 = vmatprep.subr.mxu0 %v60
  %1274 = vmatpush1.msra.mxu0 %v59
  %1275 = vmatprep.subr.mxu0 %v57
  %1276 = vmatpush1.msra.mxu0 %v56
  %1277 = vmatprep.subr.mxu0 %v54
  %1278 = vmatpush1.msra.mxu0 %v53
  %1279 = vmatprep.subr.mxu0 %v51
  %1280 = vmatpush1.msra.mxu0 %v50
  %1281 = vmatprep.subr.mxu0 %v48
  %1282 = vmatpush1.msra.mxu0 %v47
  %1283 = vmatprep.subr.mxu0 %v45
  %1284 = vmatpush1.msra.mxu0 %v44
  %1285 = vmatprep.subr.mxu0 %v42
  %1286 = vmatpush1.msra.mxu0 %v41
  %1287 = vmatprep.subr.mxu0 %v39
  %1288 = vmatpush1.msra.mxu0 %v38
  %1289 = vmatprep.subr.mxu0 %v36
  %1290 = vmatpush1.msra.mxu0 %v35
  %1291 = vmatprep.subr.mxu0 %v33
  %1292 = vmatpush1.msra.mxu0 %v32
  %1293 = vmatprep.subr.mxu0 %v30
  %1294 = vmatpush1.msra.mxu0 %v29
  %1295 = vmatprep.subr.mxu0 %v27
  %1296 = vmatpush1.msra.mxu0 %v26
  %1297 = vmatprep.subr.mxu0 %v24
  %1298 = vmatpush1.msra.mxu0 %v23
  %1299 = vmatprep.subr.mxu0 0.0
  %1300 = vmatpush2.msra.mxu0 0.0
  %1301 = vmatprep.subr.mxu0 0.0
  %1302 = vmatpush2.msra.mxu0 0.0
  %1303 = vmatprep.subr.mxu0 0.0
  %1304 = vmatpush2.msra.mxu0 0.0
  %1305 = vmatprep.subr.mxu0 0.0
  %1306 = vmatpush2.msra.mxu0 0.0
  %1307 = vmatprep.subr.mxu0 0.0
  %1308 = vmatpush2.msra.mxu0 0.0
  %1309 = vmatprep.subr.mxu0 0.0
  %1310 = vmatpush2.msra.mxu0 0.0
  %1311 = vmatprep.subr.mxu0 0.0
  %1312 = vmatpush2.msra.mxu0 0.0
  %1313 = vmatprep.subr.mxu0 0.0
  %1314 = vmatpush2.msra.mxu0 0.0
  %1315 = vmatprep.subr.mxu0 0.0
  %1316 = vmatpush2.msra.mxu0 0.0
  %1317 = vmatprep.subr.mxu0 0.0
  %1318 = vmatpush2.msra.mxu0 0.0
  %1319 = vmatprep.subr.mxu0 0.0
  %1320 = vmatpush2.msra.mxu0 0.0
  %1321 = vmatprep.subr.mxu0 0.0
  %1322 = vmatpush2.msra.mxu0 0.0
  %1323 = vmatprep.subr.mxu0 0.0
  %1324 = vmatpush2.msra.mxu0 0.0
  %1325 = vmatprep.subr.mxu0 0.0
  %1326 = vmatpush2.msra.mxu0 0.0
  %1327 = vmatprep.subr.mxu0 0.0
  %1328 = vmatpush2.msra.mxu0 0.0
  %1329 = vmatprep.subr.mxu0 0.0
  %1330 = vmatpush2.msra.mxu0 0.0
  %1331 = vmatprep.mubr.f32.mxu0 0.0
  %1332 = vmatmul.mubr.f32.gmra.mxu0 %v1260
  %v1333 = vpop.f32.mrf.mxu0
  %v1334 = vadd.f32 %v76, %v1333
  %v1335 = vpop.f32.mrf.mxu0
  %v1336 = vadd.f32 %v80, %v1335
  %1337 = vdwg.mxu0
  %1338 = vmatprep.subr.mxu0 0.0
  %1339 = vmatpush1.msra.mxu0 %v70
  %1340 = vmatprep.subr.mxu0 0.0
  %1341 = vmatpush1.msra.mxu0 %v67
  %1342 = vmatprep.subr.mxu0 0.0
  %1343 = vmatpush1.msra.mxu0 %v64
  %1344 = vmatprep.subr.mxu0 0.0
  %1345 = vmatpush1.msra.mxu0 %v61
  %1346 = vmatprep.subr.mxu0 0.0
  %1347 = vmatpush1.msra.mxu0 %v58
  %1348 = vmatprep.subr.mxu0 0.0
  %1349 = vmatpush1.msra.mxu0 %v55
  %1350 = vmatprep.subr.mxu0 0.0
  %1351 = vmatpush1.msra.mxu0 %v52
  %1352 = vmatprep.subr.mxu0 0.0
  %1353 = vmatpush1.msra.mxu0 %v49
  %1354 = vmatprep.subr.mxu0 0.0
  %1355 = vmatpush1.msra.mxu0 %v46
  %1356 = vmatprep.subr.mxu0 0.0
  %1357 = vmatpush1.msra.mxu0 %v43
  %1358 = vmatprep.subr.mxu0 0.0
  %1359 = vmatpush1.msra.mxu0 %v40
  %1360 = vmatprep.subr.mxu0 0.0
  %1361 = vmatpush1.msra.mxu0 %v37
  %1362 = vmatprep.subr.mxu0 0.0
  %1363 = vmatpush1.msra.mxu0 %v34
  %1364 = vmatprep.subr.mxu0 0.0
  %1365 = vmatpush1.msra.mxu0 %v31
  %1366 = vmatprep.subr.mxu0 0.0
  %1367 = vmatpush1.msra.mxu0 %v28
  %1368 = vmatprep.subr.mxu0 0.0
  %1369 = vmatpush1.msra.mxu0 %v25
  %1370 = vmatprep.subr.mxu0 0.0
  %1371 = vmatpush2.msra.mxu0 0.0
  %1372 = vmatprep.subr.mxu0 0.0
  %1373 = vmatpush2.msra.mxu0 0.0
  %1374 = vmatprep.subr.mxu0 0.0
  %1375 = vmatpush2.msra.mxu0 0.0
  %1376 = vmatprep.subr.mxu0 0.0
  %1377 = vmatpush2.msra.mxu0 0.0
  %1378 = vmatprep.subr.mxu0 0.0
  %1379 = vmatpush2.msra.mxu0 0.0
  %1380 = vmatprep.subr.mxu0 0.0
  %1381 = vmatpush2.msra.mxu0 0.0
  %1382 = vmatprep.subr.mxu0 0.0
  %1383 = vmatpush2.msra.mxu0 0.0
  %1384 = vmatprep.subr.mxu0 0.0
  %1385 = vmatpush2.msra.mxu0 0.0
  %1386 = vmatprep.subr.mxu0 0.0
  %1387 = vmatpush2.msra.mxu0 0.0
  %1388 = vmatprep.subr.mxu0 0.0
  %1389 = vmatpush2.msra.mxu0 0.0
  %1390 = vmatprep.subr.mxu0 0.0
  %1391 = vmatpush2.msra.mxu0 0.0
  %1392 = vmatprep.subr.mxu0 0.0
  %1393 = vmatpush2.msra.mxu0 0.0
  %1394 = vmatprep.subr.mxu0 0.0
  %1395 = vmatpush2.msra.mxu0 0.0
  %1396 = vmatprep.subr.mxu0 0.0
  %1397 = vmatpush2.msra.mxu0 0.0
  %1398 = vmatprep.subr.mxu0 0.0
  %1399 = vmatpush2.msra.mxu0 0.0
  %1400 = vmatprep.subr.mxu0 0.0
  %1401 = vmatpush2.msra.mxu0 0.0
  %1402 = vmatprep.mubr.f32.mxu0 0.0
  %1403 = vmatmul.mubr.f32.gmra.mxu0 %v1260
  %v1404 = vpop.f32.mrf.mxu0
  %v1405 = vadd.f32 %v84, %v1404
  %v1406 = vpop.f32.mrf.mxu0
  %1407 = vdwg.mxu0
  %v1408 = vadd.f32 %v1264, %v1334
  %v1409 = vxor.u32 %v1408, 2147483648
  %v1410 = vmul.f32 %v1409, 1.442695
  %v1411 = vpow.pop %v1410
  %v1412 = vadd.f32 %v1411, 1.0
  %v1413 = vrcp.pop %v1412
  %v1414 = vmul.f32 1.0, %v1413
  %v1415 = vadd.f32 %v1265, %v1336
  %v1416 = vxor.u32 %v1415, 2147483648
  %v1417 = vmul.f32 %v1416, 1.442695
  %v1418 = vpow.pop %v1417
  %v1419 = vadd.f32 %v1418, 1.0
  %v1420 = vrcp.pop %v1419
  %v1421 = vmul.f32 1.0, %v1420
  %v1422 = vmul.f32 %v1414, %v1405
  %v1423 = vadd.f32 %v1266, %v1422
  %v1424 = vtanh.pop %v1423
  %v1425 = vsub.f32 1.0, %v1421
  %v1426 = vmul.f32 %v1425, %v1424
  %v1427 = vmul.f32 %v1421, %v1260
  %v1428 = vadd.f32 %v1426, %v1427
  %s1429 = scalar_lea.vmem %s4, 56
  %1430 = vst [vmem:[%s1429] sm:$0xff] %v1428
  %1431 = vst [vmem:[#allocation2] sm:$0xff] %v1428
  // Predicated region
  $region22: #{gru_forward.2} parent=0 // pred_check
    _
  $region23: #{gru_forward.2} parent=0 // pred_check_branch
    %1433 = sbr.rel (0) target = $region25
  $region24: #{gru_forward.2} parent=0 // pred_region
    _
  $region25: #{gru_forward.2} parent=0 // pred_fallthru
    _
  // Predicated region
  $region26: #{gru_forward.2} parent=0 // pred_check
    _
  $region27: #{gru_forward.2} parent=0 // pred_check_branch
    %1435 = sbr.rel (0) target = $region29
  $region28: #{gru_forward.2} parent=0 // pred_region
    _
  $region29: #{gru_forward.2} parent=0 // pred_fallthru
    _

</llo_original>
